<compile_context>
chip_gen: v6e
topology: v6e:2x2x1
jax: 0.10.0
libtpu: 0.0.40
codegen_flags: <defaults>
</compile_context>

<pallas_src>
import jax
import jax.numpy as jnp
from jax import lax
from jax.experimental import pallas as pl
from jax.experimental.pallas import tpu as pltpu

_SUBLANE = 8  # f32 sublane tile


def lstm2_encoder_kernel(
    x_ref,      # (T*Bp, F)  f32   time-major, batch padded to Bp
    wih0_ref,   # (F, 4H)    f32   layer-0 input weights, 0.5-folded i/f/o cols
    b0_ref,     # (1, 4H)    f32   layer-0 bias (b_ih+b_hh), 0.5-folded
    wbig_ref,   # (2H, 8H)   bf16  fused RHS [[wih1|whh0],[whh1|0]], 0.5-folded
    b1_ref,     # (1, 4H)    f32   layer-1 bias, 0.5-folded
    out_ref,    # (Bp, H)    f32   h_T of the last (second) layer
):
    Bp, H = out_ref.shape
    T = x_ref.shape[0] // Bp
    H4 = 4 * H

    # ---- hoisted, loop-invariant work --------------------------------------
    # Layer-0 input projection for ALL timesteps at once (one-time f32 dot),
    # bias folded in.
    precomp = (
        jnp.dot(x_ref[...], wih0_ref[...], preferred_element_type=jnp.float32)
        + b0_ref[...]
    )  # (T*Bp, 4H)
    # Hoist per-step slices: with Bp == 8 each slice is one aligned f32 vreg.
    pre = [precomp[t * Bp:(t + 1) * Bp, :] for t in range(T)]

    w_big = wbig_ref[...]                                  # (2H, 8H) bf16
    b1 = jnp.broadcast_to(b1_ref[...], (Bp, H4))           # broadcast once

    # ---- state lives in registers (tiny (8,32)/(8,128) f32 tiles) ----------
    h0 = jnp.zeros((Bp, H), jnp.float32)
    c0 = jnp.zeros((Bp, H), jnp.float32)
    h1 = jnp.zeros((Bp, H), jnp.float32)
    c1 = jnp.zeros((Bp, H), jnp.float32)
    rec0 = jnp.zeros((Bp, H4), jnp.float32)    # h0_{t-1} @ whh0 (zero at t=0)

    def gates_to_hc(gates, c_prev):
        # i/f/o gate columns were pre-scaled by 0.5 in the weights/biases, so
        # ONE tanh over the full (Bp, 4H) row gives:
        #   i/f/o = 0.5*tanh(0.5 z) + 0.5 == sigmoid(z)   (VPU affine)
        #   g     = tanh(z)
        t = jnp.tanh(gates)                    # single EUP push per cell
        i = 0.5 * t[:, 0 * H:1 * H] + 0.5
        f = 0.5 * t[:, 1 * H:2 * H] + 0.5
        g = t[:, 2 * H:3 * H]
        o = 0.5 * t[:, 3 * H:4 * H] + 0.5
        c_new = f * c_prev + i * g
        h_new = o * jnp.tanh(c_new)            # second, small EUP push
        return h_new, c_new

    # Fully unrolled time loop (T is small and static) so independent work of
    # adjacent timesteps / layers can be overlapped by the scheduler.
    for t in range(T):
        # Layer 0: input projection precomputed; recurrent term came out of
        # the previous step's fused dot.
        h0, c0 = gates_to_hc(pre[t] + rec0, c0)

        # One fused MXU push per step (bf16 operands, f32 accumulation):
        #   cols [0,4H)   -> layer-1 gates (before bias)
        #   cols [4H,8H)  -> h0_t @ whh0 == layer-0 recurrent term for t+1
        lhs = jnp.concatenate([h0, h1], axis=1).astype(jnp.bfloat16)
        fused = jnp.dot(lhs, w_big, preferred_element_type=jnp.float32)
        rec0 = fused[:, H4:]
        h1, c1 = gates_to_hc(fused[:, :H4] + b1, c1)
        # TODO(synk): on v7x, swap the concat + fused dot for two accumulating
        # dots (h0@wih1 + h1@whh1) to exploit the MRB and spare the XLU concat.

    # hidden_state[-1, :, :] == h_T of the last (second) layer
    out_ref[...] = h1


def encoder_forward(x, params):
    """x: (T, B, F) float32 (time-major). Returns (B, H) float32."""
    T, B, F = x.shape
    H = params["whh0"].shape[0]

    # Fold the sigmoid 0.5 pre-scale into the i/f/o gate columns
    # (PyTorch gate order i, f, g, o) -> single tanh per cell in the kernel.
    gate_scale = jnp.concatenate(
        [jnp.full((1, H), 0.5, jnp.float32),
         jnp.full((1, H), 0.5, jnp.float32),
         jnp.ones((1, H), jnp.float32),
         jnp.full((1, H), 0.5, jnp.float32)], axis=1)

    wih0 = params["wih0"] * gate_scale          # (F, 4H)
    whh0 = params["whh0"] * gate_scale          # (H, 4H)
    b0 = params["b0"] * gate_scale              # (1, 4H)
    wih1 = params["wih1"] * gate_scale          # (H, 4H)
    whh1 = params["whh1"] * gate_scale          # (H, 4H)
    b1 = params["b1"] * gate_scale              # (1, 4H)

    # Fused recurrent RHS: one (B,2H)@(2H,8H) matmul per step yields both the
    # layer-1 gates and layer-0's next-step recurrent term.  bf16 weights ->
    # single-pass MXU (accumulation stays f32 in the kernel).
    w_big = jnp.concatenate(
        [jnp.concatenate([wih1, whh0], axis=1),
         jnp.concatenate([whh1, jnp.zeros((H, 4 * H), jnp.float32)], axis=1)],
        axis=0).astype(jnp.bfloat16)            # (2H, 8H)

    # Pad batch to a full f32 sublane tile so every per-step operand is a
    # whole (8,128) vreg; padded rows are dropped after the call.
    Bp = max(_SUBLANE, ((B + _SUBLANE - 1) // _SUBLANE) * _SUBLANE)
    x_p = jnp.pad(x, ((0, 0), (0, Bp - B), (0, 0)))
    x_flat = x_p.reshape(T * Bp, F)

    vmem = pl.BlockSpec(memory_space=pltpu.MemorySpace.VMEM)
    out = pl.pallas_call(
        lstm2_encoder_kernel,
        out_shape=jax.ShapeDtypeStruct((Bp, H), jnp.float32),
        in_specs=[vmem] * 5,
        out_specs=vmem,
    )(x_flat, wih0, b0, w_big, b1)
    # No grid / no BlockSpec tiling: ~60 KiB VMEM footprint, latency-bound.
    # TODO(synk): add a ("parallel",) batch grid only once Bp >= 16 so the
    # second v7x TensorCore gets at least two sublane tiles of rows per core.
    return out[:B]


def encoder_reference(x, params):
    """Pure-JAX reference (same math as torch nn.LSTM) for a sanity check."""
    T, B, F = x.shape
    H = params["whh0"].shape[0]

    def sigmoid(z):
        return 1.0 / (1.0 + jnp.exp(-z))

    def cell(x_t, h, c, wih, whh, b):
        gates = x_t @ wih + h @ whh + b
        i = sigmoid(gates[:, 0 * H:1 * H])
        f = sigmoid(gates[:, 1 * H:2 * H])
        g = jnp.tanh(gates[:, 2 * H:3 * H])
        o = sigmoid(gates[:, 3 * H:4 * H])
        c_new = f * c + i * g
        h_new = o * jnp.tanh(c_new)
        return h_new, c_new

    def step(carry, x_t):
        h0, c0, h1, c1 = carry
        h0, c0 = cell(x_t, h0, c0, params["wih0"], params["whh0"], params["b0"])
        h1, c1 = cell(h0, h1, c1, params["wih1"], params["whh1"], params["b1"])
        return (h0, c0, h1, c1), None

    init = tuple(jnp.zeros((B, H), jnp.float32) for _ in range(4))
    (h0, c0, h1, c1), _ = lax.scan(step, init, x)
    return h1


def init_params(key, features, hidden):
    """Deterministic init matching PyTorch LSTM param shapes:
       weight_ih_l0 (4H,F), weight_hh_l0 (4H,H), bias_ih/hh_l0 (4H,)
       weight_ih_l1 (4H,H), weight_hh_l1 (4H,H), bias_ih/hh_l1 (4H,)
       Uniform(-1/sqrt(H), 1/sqrt(H)), as in torch's reset_parameters."""
    k = 1.0 / jnp.sqrt(jnp.float32(hidden))
    keys = jax.random.split(key, 8)
    u = lambda kk, shape: jax.random.uniform(kk, shape, jnp.float32, -k, k)

    w_ih_l0 = u(keys[0], (4 * hidden, features))
    w_hh_l0 = u(keys[1], (4 * hidden, hidden))
    b_ih_l0 = u(keys[2], (4 * hidden,))
    b_hh_l0 = u(keys[3], (4 * hidden,))
    w_ih_l1 = u(keys[4], (4 * hidden, hidden))
    w_hh_l1 = u(keys[5], (4 * hidden, hidden))
    b_ih_l1 = u(keys[6], (4 * hidden,))
    b_hh_l1 = u(keys[7], (4 * hidden,))

    return {
        "wih0": w_ih_l0.T,                               # (F, 4H)
        "whh0": w_hh_l0.T,                               # (H, 4H)
        "b0": (b_ih_l0 + b_hh_l0)[None, :],              # (1, 4H)
        "wih1": w_ih_l1.T,                               # (H, 4H)
        "whh1": w_hh_l1.T,                               # (H, 4H)
        "b1": (b_ih_l1 + b_hh_l1)[None, :],              # (1, 4H)
    }


if __name__ == "__main__":
    # Config: features=8, latent_dim=32; input: seq=8, batch=2 (time-major).
    SEQ, BATCH, FEATURES, LATENT = 8, 2, 8, 32

    root = jax.random.PRNGKey(0)
    k_x, k_p = jax.random.split(root)
    x = jax.random.normal(k_x, (SEQ, BATCH, FEATURES), jnp.float32)
    params = init_params(k_p, FEATURES, LATENT)

    out = jax.jit(encoder_forward)(x, params)
    out = jax.block_until_ready(out)

    ref = jax.block_until_ready(encoder_reference(x, params))
    assert out.shape == (BATCH, LATENT)
    assert jnp.allclose(out, ref, atol=5e-3, rtol=5e-3), (
        f"max abs diff = {jnp.max(jnp.abs(out - ref))}"
    )

    print("KERNEL_OK")
</pallas_src>

<mosaic_0001>
module attributes {stable_mosaic.version = 11 : i64} {
  func.func @lstm2_encoder_kernel(%arg0: memref<64x8xf32, #tpu.memory_space<vmem>>, %arg1: memref<8x128xf32, #tpu.memory_space<vmem>>, %arg2: memref<1x128xf32, #tpu.memory_space<vmem>>, %arg3: memref<64x256xbf16, #tpu.memory_space<vmem>>, %arg4: memref<1x128xf32, #tpu.memory_space<vmem>>, %arg5: memref<8x32xf32, #tpu.memory_space<vmem>>) attributes {dimension_semantics = [], scalar_prefetch = 0 : i64, scratch_operands = 0 : i64, tpu.core_type = #tpu.core_type<tc>} {
    %c0 = arith.constant 0 : index
    %c0_0 = arith.constant 0 : index
    %0 = vector.load %arg0[%c0, %c0_0] : memref<64x8xf32, #tpu.memory_space<vmem>>, vector<64x8xf32>
    %c0_1 = arith.constant 0 : index
    %c0_2 = arith.constant 0 : index
    %1 = vector.load %arg1[%c0_1, %c0_2] : memref<8x128xf32, #tpu.memory_space<vmem>>, vector<8x128xf32>
    %cst = arith.constant dense<0.000000e+00> : vector<64x128xf32>
    %2 = tpu.matmul %0, %1, %cst {dimension_numbers = #tpu.dot_dimension_numbers<[1], [0], [0], [1], [0, 0, 1, 1], [], []>} : vector<64x8xf32>, vector<8x128xf32>, vector<64x128xf32> -> vector<64x128xf32>
    %c0_3 = arith.constant 0 : index
    %c0_4 = arith.constant 0 : index
    %3 = vector.load %arg2[%c0_3, %c0_4] : memref<1x128xf32, #tpu.memory_space<vmem>>, vector<1x128xf32>
    %4 = vector.broadcast %3 : vector<1x128xf32> to vector<64x128xf32>
    %5 = arith.addf %2, %4 : vector<64x128xf32>
    %6 = vector.extract_strided_slice %5 {offsets = [0, 0], sizes = [8, 128], strides = [1, 1]} : vector<64x128xf32> to vector<8x128xf32>
    %7 = vector.extract_strided_slice %5 {offsets = [8, 0], sizes = [8, 128], strides = [1, 1]} : vector<64x128xf32> to vector<8x128xf32>
    %8 = vector.extract_strided_slice %5 {offsets = [16, 0], sizes = [8, 128], strides = [1, 1]} : vector<64x128xf32> to vector<8x128xf32>
    %9 = vector.extract_strided_slice %5 {offsets = [24, 0], sizes = [8, 128], strides = [1, 1]} : vector<64x128xf32> to vector<8x128xf32>
    %10 = vector.extract_strided_slice %5 {offsets = [32, 0], sizes = [8, 128], strides = [1, 1]} : vector<64x128xf32> to vector<8x128xf32>
    %11 = vector.extract_strided_slice %5 {offsets = [40, 0], sizes = [8, 128], strides = [1, 1]} : vector<64x128xf32> to vector<8x128xf32>
    %12 = vector.extract_strided_slice %5 {offsets = [48, 0], sizes = [8, 128], strides = [1, 1]} : vector<64x128xf32> to vector<8x128xf32>
    %13 = vector.extract_strided_slice %5 {offsets = [56, 0], sizes = [8, 128], strides = [1, 1]} : vector<64x128xf32> to vector<8x128xf32>
    %c0_5 = arith.constant 0 : index
    %c0_6 = arith.constant 0 : index
    %14 = vector.load %arg3[%c0_5, %c0_6] : memref<64x256xbf16, #tpu.memory_space<vmem>>, vector<64x256xbf16>
    %c0_7 = arith.constant 0 : index
    %c0_8 = arith.constant 0 : index
    %15 = vector.load %arg4[%c0_7, %c0_8] : memref<1x128xf32, #tpu.memory_space<vmem>>, vector<1x128xf32>
    %16 = vector.shape_cast %15 : vector<1x128xf32> to vector<1x128xf32>
    %17 = vector.broadcast %16 : vector<1x128xf32> to vector<8x128xf32>
    %cst_9 = arith.constant 0.000000e+00 : f32
    %18 = vector.broadcast %cst_9 : f32 to vector<8x32xf32>
    %cst_10 = arith.constant 0.000000e+00 : f32
    %19 = vector.broadcast %cst_10 : f32 to vector<8x32xf32>
    %cst_11 = arith.constant 0.000000e+00 : f32
    %20 = vector.broadcast %cst_11 : f32 to vector<8x32xf32>
    %cst_12 = arith.constant 0.000000e+00 : f32
    %21 = vector.broadcast %cst_12 : f32 to vector<8x128xf32>
    %22 = arith.addf %6, %21 : vector<8x128xf32>
    %23 = math.tanh %22 : vector<8x128xf32>
    %24 = vector.extract_strided_slice %23 {offsets = [0, 0], sizes = [8, 32], strides = [1, 1]} : vector<8x128xf32> to vector<8x32xf32>
    %cst_13 = arith.constant 5.000000e-01 : f32
    %25 = vector.broadcast %cst_13 : f32 to vector<8x32xf32>
    %26 = arith.mulf %25, %24 : vector<8x32xf32>
    %cst_14 = arith.constant 5.000000e-01 : f32
    %27 = vector.broadcast %cst_14 : f32 to vector<8x32xf32>
    %28 = arith.addf %26, %27 : vector<8x32xf32>
    %29 = vector.extract_strided_slice %23 {offsets = [0, 32], sizes = [8, 32], strides = [1, 1]} : vector<8x128xf32> to vector<8x32xf32>
    %cst_15 = arith.constant 5.000000e-01 : f32
    %30 = vector.broadcast %cst_15 : f32 to vector<8x32xf32>
    %31 = arith.mulf %30, %29 : vector<8x32xf32>
    %cst_16 = arith.constant 5.000000e-01 : f32
    %32 = vector.broadcast %cst_16 : f32 to vector<8x32xf32>
    %33 = arith.addf %31, %32 : vector<8x32xf32>
    %34 = vector.extract_strided_slice %23 {offsets = [0, 64], sizes = [8, 32], strides = [1, 1]} : vector<8x128xf32> to vector<8x32xf32>
    %35 = vector.extract_strided_slice %23 {offsets = [0, 96], sizes = [8, 32], strides = [1, 1]} : vector<8x128xf32> to vector<8x32xf32>
    %cst_17 = arith.constant 5.000000e-01 : f32
    %36 = vector.broadcast %cst_17 : f32 to vector<8x32xf32>
    %37 = arith.mulf %36, %35 : vector<8x32xf32>
    %cst_18 = arith.constant 5.000000e-01 : f32
    %38 = vector.broadcast %cst_18 : f32 to vector<8x32xf32>
    %39 = arith.addf %37, %38 : vector<8x32xf32>
    %40 = arith.mulf %33, %18 : vector<8x32xf32>
    %41 = arith.mulf %28, %34 : vector<8x32xf32>
    %42 = arith.addf %40, %41 : vector<8x32xf32>
    %43 = math.tanh %42 : vector<8x32xf32>
    %44 = arith.mulf %39, %43 : vector<8x32xf32>
    %45 = tpu.concatenate %44, %19 in 1 : vector<8x32xf32>, vector<8x32xf32> -> vector<8x64xf32>
    %46 = arith.truncf %45 : vector<8x64xf32> to vector<8x64xbf16>
    %cst_19 = arith.constant dense<0.000000e+00> : vector<8x256xf32>
    %47 = tpu.matmul %46, %14, %cst_19 {dimension_numbers = #tpu.dot_dimension_numbers<[1], [0], [0], [1], [0, 0, 1, 1], [], []>} : vector<8x64xbf16>, vector<64x256xbf16>, vector<8x256xf32> -> vector<8x256xf32>
    %48 = vector.extract_strided_slice %47 {offsets = [0, 128], sizes = [8, 128], strides = [1, 1]} : vector<8x256xf32> to vector<8x128xf32>
    %49 = vector.extract_strided_slice %47 {offsets = [0, 0], sizes = [8, 128], strides = [1, 1]} : vector<8x256xf32> to vector<8x128xf32>
    %50 = arith.addf %49, %17 : vector<8x128xf32>
    %51 = math.tanh %50 : vector<8x128xf32>
    %52 = vector.extract_strided_slice %51 {offsets = [0, 0], sizes = [8, 32], strides = [1, 1]} : vector<8x128xf32> to vector<8x32xf32>
    %cst_20 = arith.constant 5.000000e-01 : f32
    %53 = vector.broadcast %cst_20 : f32 to vector<8x32xf32>
    %54 = arith.mulf %53, %52 : vector<8x32xf32>
    %cst_21 = arith.constant 5.000000e-01 : f32
    %55 = vector.broadcast %cst_21 : f32 to vector<8x32xf32>
    %56 = arith.addf %54, %55 : vector<8x32xf32>
    %57 = vector.extract_strided_slice %51 {offsets = [0, 32], sizes = [8, 32], strides = [1, 1]} : vector<8x128xf32> to vector<8x32xf32>
    %cst_22 = arith.constant 5.000000e-01 : f32
    %58 = vector.broadcast %cst_22 : f32 to vector<8x32xf32>
    %59 = arith.mulf %58, %57 : vector<8x32xf32>
    %cst_23 = arith.constant 5.000000e-01 : f32
    %60 = vector.broadcast %cst_23 : f32 to vector<8x32xf32>
    %61 = arith.addf %59, %60 : vector<8x32xf32>
    %62 = vector.extract_strided_slice %51 {offsets = [0, 64], sizes = [8, 32], strides = [1, 1]} : vector<8x128xf32> to vector<8x32xf32>
    %63 = vector.extract_strided_slice %51 {offsets = [0, 96], sizes = [8, 32], strides = [1, 1]} : vector<8x128xf32> to vector<8x32xf32>
    %cst_24 = arith.constant 5.000000e-01 : f32
    %64 = vector.broadcast %cst_24 : f32 to vector<8x32xf32>
    %65 = arith.mulf %64, %63 : vector<8x32xf32>
    %cst_25 = arith.constant 5.000000e-01 : f32
    %66 = vector.broadcast %cst_25 : f32 to vector<8x32xf32>
    %67 = arith.addf %65, %66 : vector<8x32xf32>
    %68 = arith.mulf %61, %20 : vector<8x32xf32>
    %69 = arith.mulf %56, %62 : vector<8x32xf32>
    %70 = arith.addf %68, %69 : vector<8x32xf32>
    %71 = math.tanh %70 : vector<8x32xf32>
    %72 = arith.mulf %67, %71 : vector<8x32xf32>
    %73 = arith.addf %7, %48 : vector<8x128xf32>
    %74 = math.tanh %73 : vector<8x128xf32>
    %75 = vector.extract_strided_slice %74 {offsets = [0, 0], sizes = [8, 32], strides = [1, 1]} : vector<8x128xf32> to vector<8x32xf32>
    %cst_26 = arith.constant 5.000000e-01 : f32
    %76 = vector.broadcast %cst_26 : f32 to vector<8x32xf32>
    %77 = arith.mulf %76, %75 : vector<8x32xf32>
    %cst_27 = arith.constant 5.000000e-01 : f32
    %78 = vector.broadcast %cst_27 : f32 to vector<8x32xf32>
    %79 = arith.addf %77, %78 : vector<8x32xf32>
    %80 = vector.extract_strided_slice %74 {offsets = [0, 32], sizes = [8, 32], strides = [1, 1]} : vector<8x128xf32> to vector<8x32xf32>
    %cst_28 = arith.constant 5.000000e-01 : f32
    %81 = vector.broadcast %cst_28 : f32 to vector<8x32xf32>
    %82 = arith.mulf %81, %80 : vector<8x32xf32>
    %cst_29 = arith.constant 5.000000e-01 : f32
    %83 = vector.broadcast %cst_29 : f32 to vector<8x32xf32>
    %84 = arith.addf %82, %83 : vector<8x32xf32>
    %85 = vector.extract_strided_slice %74 {offsets = [0, 64], sizes = [8, 32], strides = [1, 1]} : vector<8x128xf32> to vector<8x32xf32>
    %86 = vector.extract_strided_slice %74 {offsets = [0, 96], sizes = [8, 32], strides = [1, 1]} : vector<8x128xf32> to vector<8x32xf32>
    %cst_30 = arith.constant 5.000000e-01 : f32
    %87 = vector.broadcast %cst_30 : f32 to vector<8x32xf32>
    %88 = arith.mulf %87, %86 : vector<8x32xf32>
    %cst_31 = arith.constant 5.000000e-01 : f32
    %89 = vector.broadcast %cst_31 : f32 to vector<8x32xf32>
    %90 = arith.addf %88, %89 : vector<8x32xf32>
    %91 = arith.mulf %84, %42 : vector<8x32xf32>
    %92 = arith.mulf %79, %85 : vector<8x32xf32>
    %93 = arith.addf %91, %92 : vector<8x32xf32>
    %94 = math.tanh %93 : vector<8x32xf32>
    %95 = arith.mulf %90, %94 : vector<8x32xf32>
    %96 = tpu.concatenate %95, %72 in 1 : vector<8x32xf32>, vector<8x32xf32> -> vector<8x64xf32>
    %97 = arith.truncf %96 : vector<8x64xf32> to vector<8x64xbf16>
    %cst_32 = arith.constant dense<0.000000e+00> : vector<8x256xf32>
    %98 = tpu.matmul %97, %14, %cst_32 {dimension_numbers = #tpu.dot_dimension_numbers<[1], [0], [0], [1], [0, 0, 1, 1], [], []>} : vector<8x64xbf16>, vector<64x256xbf16>, vector<8x256xf32> -> vector<8x256xf32>
    %99 = vector.extract_strided_slice %98 {offsets = [0, 128], sizes = [8, 128], strides = [1, 1]} : vector<8x256xf32> to vector<8x128xf32>
    %100 = vector.extract_strided_slice %98 {offsets = [0, 0], sizes = [8, 128], strides = [1, 1]} : vector<8x256xf32> to vector<8x128xf32>
    %101 = arith.addf %100, %17 : vector<8x128xf32>
    %102 = math.tanh %101 : vector<8x128xf32>
    %103 = vector.extract_strided_slice %102 {offsets = [0, 0], sizes = [8, 32], strides = [1, 1]} : vector<8x128xf32> to vector<8x32xf32>
    %cst_33 = arith.constant 5.000000e-01 : f32
    %104 = vector.broadcast %cst_33 : f32 to vector<8x32xf32>
    %105 = arith.mulf %104, %103 : vector<8x32xf32>
    %cst_34 = arith.constant 5.000000e-01 : f32
    %106 = vector.broadcast %cst_34 : f32 to vector<8x32xf32>
    %107 = arith.addf %105, %106 : vector<8x32xf32>
    %108 = vector.extract_strided_slice %102 {offsets = [0, 32], sizes = [8, 32], strides = [1, 1]} : vector<8x128xf32> to vector<8x32xf32>
    %cst_35 = arith.constant 5.000000e-01 : f32
    %109 = vector.broadcast %cst_35 : f32 to vector<8x32xf32>
    %110 = arith.mulf %109, %108 : vector<8x32xf32>
    %cst_36 = arith.constant 5.000000e-01 : f32
    %111 = vector.broadcast %cst_36 : f32 to vector<8x32xf32>
    %112 = arith.addf %110, %111 : vector<8x32xf32>
    %113 = vector.extract_strided_slice %102 {offsets = [0, 64], sizes = [8, 32], strides = [1, 1]} : vector<8x128xf32> to vector<8x32xf32>
    %114 = vector.extract_strided_slice %102 {offsets = [0, 96], sizes = [8, 32], strides = [1, 1]} : vector<8x128xf32> to vector<8x32xf32>
    %cst_37 = arith.constant 5.000000e-01 : f32
    %115 = vector.broadcast %cst_37 : f32 to vector<8x32xf32>
    %116 = arith.mulf %115, %114 : vector<8x32xf32>
    %cst_38 = arith.constant 5.000000e-01 : f32
    %117 = vector.broadcast %cst_38 : f32 to vector<8x32xf32>
    %118 = arith.addf %116, %117 : vector<8x32xf32>
    %119 = arith.mulf %112, %70 : vector<8x32xf32>
    %120 = arith.mulf %107, %113 : vector<8x32xf32>
    %121 = arith.addf %119, %120 : vector<8x32xf32>
    %122 = math.tanh %121 : vector<8x32xf32>
    %123 = arith.mulf %118, %122 : vector<8x32xf32>
    %124 = arith.addf %8, %99 : vector<8x128xf32>
    %125 = math.tanh %124 : vector<8x128xf32>
    %126 = vector.extract_strided_slice %125 {offsets = [0, 0], sizes = [8, 32], strides = [1, 1]} : vector<8x128xf32> to vector<8x32xf32>
    %cst_39 = arith.constant 5.000000e-01 : f32
    %127 = vector.broadcast %cst_39 : f32 to vector<8x32xf32>
    %128 = arith.mulf %127, %126 : vector<8x32xf32>
    %cst_40 = arith.constant 5.000000e-01 : f32
    %129 = vector.broadcast %cst_40 : f32 to vector<8x32xf32>
    %130 = arith.addf %128, %129 : vector<8x32xf32>
    %131 = vector.extract_strided_slice %125 {offsets = [0, 32], sizes = [8, 32], strides = [1, 1]} : vector<8x128xf32> to vector<8x32xf32>
    %cst_41 = arith.constant 5.000000e-01 : f32
    %132 = vector.broadcast %cst_41 : f32 to vector<8x32xf32>
    %133 = arith.mulf %132, %131 : vector<8x32xf32>
    %cst_42 = arith.constant 5.000000e-01 : f32
    %134 = vector.broadcast %cst_42 : f32 to vector<8x32xf32>
    %135 = arith.addf %133, %134 : vector<8x32xf32>
    %136 = vector.extract_strided_slice %125 {offsets = [0, 64], sizes = [8, 32], strides = [1, 1]} : vector<8x128xf32> to vector<8x32xf32>
    %137 = vector.extract_strided_slice %125 {offsets = [0, 96], sizes = [8, 32], strides = [1, 1]} : vector<8x128xf32> to vector<8x32xf32>
    %cst_43 = arith.constant 5.000000e-01 : f32
    %138 = vector.broadcast %cst_43 : f32 to vector<8x32xf32>
    %139 = arith.mulf %138, %137 : vector<8x32xf32>
    %cst_44 = arith.constant 5.000000e-01 : f32
    %140 = vector.broadcast %cst_44 : f32 to vector<8x32xf32>
    %141 = arith.addf %139, %140 : vector<8x32xf32>
    %142 = arith.mulf %135, %93 : vector<8x32xf32>
    %143 = arith.mulf %130, %136 : vector<8x32xf32>
    %144 = arith.addf %142, %143 : vector<8x32xf32>
    %145 = math.tanh %144 : vector<8x32xf32>
    %146 = arith.mulf %141, %145 : vector<8x32xf32>
    %147 = tpu.concatenate %146, %123 in 1 : vector<8x32xf32>, vector<8x32xf32> -> vector<8x64xf32>
    %148 = arith.truncf %147 : vector<8x64xf32> to vector<8x64xbf16>
    %cst_45 = arith.constant dense<0.000000e+00> : vector<8x256xf32>
    %149 = tpu.matmul %148, %14, %cst_45 {dimension_numbers = #tpu.dot_dimension_numbers<[1], [0], [0], [1], [0, 0, 1, 1], [], []>} : vector<8x64xbf16>, vector<64x256xbf16>, vector<8x256xf32> -> vector<8x256xf32>
    %150 = vector.extract_strided_slice %149 {offsets = [0, 128], sizes = [8, 128], strides = [1, 1]} : vector<8x256xf32> to vector<8x128xf32>
    %151 = vector.extract_strided_slice %149 {offsets = [0, 0], sizes = [8, 128], strides = [1, 1]} : vector<8x256xf32> to vector<8x128xf32>
    %152 = arith.addf %151, %17 : vector<8x128xf32>
    %153 = math.tanh %152 : vector<8x128xf32>
    %154 = vector.extract_strided_slice %153 {offsets = [0, 0], sizes = [8, 32], strides = [1, 1]} : vector<8x128xf32> to vector<8x32xf32>
    %cst_46 = arith.constant 5.000000e-01 : f32
    %155 = vector.broadcast %cst_46 : f32 to vector<8x32xf32>
    %156 = arith.mulf %155, %154 : vector<8x32xf32>
    %cst_47 = arith.constant 5.000000e-01 : f32
    %157 = vector.broadcast %cst_47 : f32 to vector<8x32xf32>
    %158 = arith.addf %156, %157 : vector<8x32xf32>
    %159 = vector.extract_strided_slice %153 {offsets = [0, 32], sizes = [8, 32], strides = [1, 1]} : vector<8x128xf32> to vector<8x32xf32>
    %cst_48 = arith.constant 5.000000e-01 : f32
    %160 = vector.broadcast %cst_48 : f32 to vector<8x32xf32>
    %161 = arith.mulf %160, %159 : vector<8x32xf32>
    %cst_49 = arith.constant 5.000000e-01 : f32
    %162 = vector.broadcast %cst_49 : f32 to vector<8x32xf32>
    %163 = arith.addf %161, %162 : vector<8x32xf32>
    %164 = vector.extract_strided_slice %153 {offsets = [0, 64], sizes = [8, 32], strides = [1, 1]} : vector<8x128xf32> to vector<8x32xf32>
    %165 = vector.extract_strided_slice %153 {offsets = [0, 96], sizes = [8, 32], strides = [1, 1]} : vector<8x128xf32> to vector<8x32xf32>
    %cst_50 = arith.constant 5.000000e-01 : f32
    %166 = vector.broadcast %cst_50 : f32 to vector<8x32xf32>
    %167 = arith.mulf %166, %165 : vector<8x32xf32>
    %cst_51 = arith.constant 5.000000e-01 : f32
    %168 = vector.broadcast %cst_51 : f32 to vector<8x32xf32>
    %169 = arith.addf %167, %168 : vector<8x32xf32>
    %170 = arith.mulf %163, %121 : vector<8x32xf32>
    %171 = arith.mulf %158, %164 : vector<8x32xf32>
    %172 = arith.addf %170, %171 : vector<8x32xf32>
    %173 = math.tanh %172 : vector<8x32xf32>
    %174 = arith.mulf %169, %173 : vector<8x32xf32>
    %175 = arith.addf %9, %150 : vector<8x128xf32>
    %176 = math.tanh %175 : vector<8x128xf32>
    %177 = vector.extract_strided_slice %176 {offsets = [0, 0], sizes = [8, 32], strides = [1, 1]} : vector<8x128xf32> to vector<8x32xf32>
    %cst_52 = arith.constant 5.000000e-01 : f32
    %178 = vector.broadcast %cst_52 : f32 to vector<8x32xf32>
    %179 = arith.mulf %178, %177 : vector<8x32xf32>
    %cst_53 = arith.constant 5.000000e-01 : f32
    %180 = vector.broadcast %cst_53 : f32 to vector<8x32xf32>
    %181 = arith.addf %179, %180 : vector<8x32xf32>
    %182 = vector.extract_strided_slice %176 {offsets = [0, 32], sizes = [8, 32], strides = [1, 1]} : vector<8x128xf32> to vector<8x32xf32>
    %cst_54 = arith.constant 5.000000e-01 : f32
    %183 = vector.broadcast %cst_54 : f32 to vector<8x32xf32>
    %184 = arith.mulf %183, %182 : vector<8x32xf32>
    %cst_55 = arith.constant 5.000000e-01 : f32
    %185 = vector.broadcast %cst_55 : f32 to vector<8x32xf32>
    %186 = arith.addf %184, %185 : vector<8x32xf32>
    %187 = vector.extract_strided_slice %176 {offsets = [0, 64], sizes = [8, 32], strides = [1, 1]} : vector<8x128xf32> to vector<8x32xf32>
    %188 = vector.extract_strided_slice %176 {offsets = [0, 96], sizes = [8, 32], strides = [1, 1]} : vector<8x128xf32> to vector<8x32xf32>
    %cst_56 = arith.constant 5.000000e-01 : f32
    %189 = vector.broadcast %cst_56 : f32 to vector<8x32xf32>
    %190 = arith.mulf %189, %188 : vector<8x32xf32>
    %cst_57 = arith.constant 5.000000e-01 : f32
    %191 = vector.broadcast %cst_57 : f32 to vector<8x32xf32>
    %192 = arith.addf %190, %191 : vector<8x32xf32>
    %193 = arith.mulf %186, %144 : vector<8x32xf32>
    %194 = arith.mulf %181, %187 : vector<8x32xf32>
    %195 = arith.addf %193, %194 : vector<8x32xf32>
    %196 = math.tanh %195 : vector<8x32xf32>
    %197 = arith.mulf %192, %196 : vector<8x32xf32>
    %198 = tpu.concatenate %197, %174 in 1 : vector<8x32xf32>, vector<8x32xf32> -> vector<8x64xf32>
    %199 = arith.truncf %198 : vector<8x64xf32> to vector<8x64xbf16>
    %cst_58 = arith.constant dense<0.000000e+00> : vector<8x256xf32>
    %200 = tpu.matmul %199, %14, %cst_58 {dimension_numbers = #tpu.dot_dimension_numbers<[1], [0], [0], [1], [0, 0, 1, 1], [], []>} : vector<8x64xbf16>, vector<64x256xbf16>, vector<8x256xf32> -> vector<8x256xf32>
    %201 = vector.extract_strided_slice %200 {offsets = [0, 128], sizes = [8, 128], strides = [1, 1]} : vector<8x256xf32> to vector<8x128xf32>
    %202 = vector.extract_strided_slice %200 {offsets = [0, 0], sizes = [8, 128], strides = [1, 1]} : vector<8x256xf32> to vector<8x128xf32>
    %203 = arith.addf %202, %17 : vector<8x128xf32>
    %204 = math.tanh %203 : vector<8x128xf32>
    %205 = vector.extract_strided_slice %204 {offsets = [0, 0], sizes = [8, 32], strides = [1, 1]} : vector<8x128xf32> to vector<8x32xf32>
    %cst_59 = arith.constant 5.000000e-01 : f32
    %206 = vector.broadcast %cst_59 : f32 to vector<8x32xf32>
    %207 = arith.mulf %206, %205 : vector<8x32xf32>
    %cst_60 = arith.constant 5.000000e-01 : f32
    %208 = vector.broadcast %cst_60 : f32 to vector<8x32xf32>
    %209 = arith.addf %207, %208 : vector<8x32xf32>
    %210 = vector.extract_strided_slice %204 {offsets = [0, 32], sizes = [8, 32], strides = [1, 1]} : vector<8x128xf32> to vector<8x32xf32>
    %cst_61 = arith.constant 5.000000e-01 : f32
    %211 = vector.broadcast %cst_61 : f32 to vector<8x32xf32>
    %212 = arith.mulf %211, %210 : vector<8x32xf32>
    %cst_62 = arith.constant 5.000000e-01 : f32
    %213 = vector.broadcast %cst_62 : f32 to vector<8x32xf32>
    %214 = arith.addf %212, %213 : vector<8x32xf32>
    %215 = vector.extract_strided_slice %204 {offsets = [0, 64], sizes = [8, 32], strides = [1, 1]} : vector<8x128xf32> to vector<8x32xf32>
    %216 = vector.extract_strided_slice %204 {offsets = [0, 96], sizes = [8, 32], strides = [1, 1]} : vector<8x128xf32> to vector<8x32xf32>
    %cst_63 = arith.constant 5.000000e-01 : f32
    %217 = vector.broadcast %cst_63 : f32 to vector<8x32xf32>
    %218 = arith.mulf %217, %216 : vector<8x32xf32>
    %cst_64 = arith.constant 5.000000e-01 : f32
    %219 = vector.broadcast %cst_64 : f32 to vector<8x32xf32>
    %220 = arith.addf %218, %219 : vector<8x32xf32>
    %221 = arith.mulf %214, %172 : vector<8x32xf32>
    %222 = arith.mulf %209, %215 : vector<8x32xf32>
    %223 = arith.addf %221, %222 : vector<8x32xf32>
    %224 = math.tanh %223 : vector<8x32xf32>
    %225 = arith.mulf %220, %224 : vector<8x32xf32>
    %226 = arith.addf %10, %201 : vector<8x128xf32>
    %227 = math.tanh %226 : vector<8x128xf32>
    %228 = vector.extract_strided_slice %227 {offsets = [0, 0], sizes = [8, 32], strides = [1, 1]} : vector<8x128xf32> to vector<8x32xf32>
    %cst_65 = arith.constant 5.000000e-01 : f32
    %229 = vector.broadcast %cst_65 : f32 to vector<8x32xf32>
    %230 = arith.mulf %229, %228 : vector<8x32xf32>
    %cst_66 = arith.constant 5.000000e-01 : f32
    %231 = vector.broadcast %cst_66 : f32 to vector<8x32xf32>
    %232 = arith.addf %230, %231 : vector<8x32xf32>
    %233 = vector.extract_strided_slice %227 {offsets = [0, 32], sizes = [8, 32], strides = [1, 1]} : vector<8x128xf32> to vector<8x32xf32>
    %cst_67 = arith.constant 5.000000e-01 : f32
    %234 = vector.broadcast %cst_67 : f32 to vector<8x32xf32>
    %235 = arith.mulf %234, %233 : vector<8x32xf32>
    %cst_68 = arith.constant 5.000000e-01 : f32
    %236 = vector.broadcast %cst_68 : f32 to vector<8x32xf32>
    %237 = arith.addf %235, %236 : vector<8x32xf32>
    %238 = vector.extract_strided_slice %227 {offsets = [0, 64], sizes = [8, 32], strides = [1, 1]} : vector<8x128xf32> to vector<8x32xf32>
    %239 = vector.extract_strided_slice %227 {offsets = [0, 96], sizes = [8, 32], strides = [1, 1]} : vector<8x128xf32> to vector<8x32xf32>
    %cst_69 = arith.constant 5.000000e-01 : f32
    %240 = vector.broadcast %cst_69 : f32 to vector<8x32xf32>
    %241 = arith.mulf %240, %239 : vector<8x32xf32>
    %cst_70 = arith.constant 5.000000e-01 : f32
    %242 = vector.broadcast %cst_70 : f32 to vector<8x32xf32>
    %243 = arith.addf %241, %242 : vector<8x32xf32>
    %244 = arith.mulf %237, %195 : vector<8x32xf32>
    %245 = arith.mulf %232, %238 : vector<8x32xf32>
    %246 = arith.addf %244, %245 : vector<8x32xf32>
    %247 = math.tanh %246 : vector<8x32xf32>
    %248 = arith.mulf %243, %247 : vector<8x32xf32>
    %249 = tpu.concatenate %248, %225 in 1 : vector<8x32xf32>, vector<8x32xf32> -> vector<8x64xf32>
    %250 = arith.truncf %249 : vector<8x64xf32> to vector<8x64xbf16>
    %cst_71 = arith.constant dense<0.000000e+00> : vector<8x256xf32>
    %251 = tpu.matmul %250, %14, %cst_71 {dimension_numbers = #tpu.dot_dimension_numbers<[1], [0], [0], [1], [0, 0, 1, 1], [], []>} : vector<8x64xbf16>, vector<64x256xbf16>, vector<8x256xf32> -> vector<8x256xf32>
    %252 = vector.extract_strided_slice %251 {offsets = [0, 128], sizes = [8, 128], strides = [1, 1]} : vector<8x256xf32> to vector<8x128xf32>
    %253 = vector.extract_strided_slice %251 {offsets = [0, 0], sizes = [8, 128], strides = [1, 1]} : vector<8x256xf32> to vector<8x128xf32>
    %254 = arith.addf %253, %17 : vector<8x128xf32>
    %255 = math.tanh %254 : vector<8x128xf32>
    %256 = vector.extract_strided_slice %255 {offsets = [0, 0], sizes = [8, 32], strides = [1, 1]} : vector<8x128xf32> to vector<8x32xf32>
    %cst_72 = arith.constant 5.000000e-01 : f32
    %257 = vector.broadcast %cst_72 : f32 to vector<8x32xf32>
    %258 = arith.mulf %257, %256 : vector<8x32xf32>
    %cst_73 = arith.constant 5.000000e-01 : f32
    %259 = vector.broadcast %cst_73 : f32 to vector<8x32xf32>
    %260 = arith.addf %258, %259 : vector<8x32xf32>
    %261 = vector.extract_strided_slice %255 {offsets = [0, 32], sizes = [8, 32], strides = [1, 1]} : vector<8x128xf32> to vector<8x32xf32>
    %cst_74 = arith.constant 5.000000e-01 : f32
    %262 = vector.broadcast %cst_74 : f32 to vector<8x32xf32>
    %263 = arith.mulf %262, %261 : vector<8x32xf32>
    %cst_75 = arith.constant 5.000000e-01 : f32
    %264 = vector.broadcast %cst_75 : f32 to vector<8x32xf32>
    %265 = arith.addf %263, %264 : vector<8x32xf32>
    %266 = vector.extract_strided_slice %255 {offsets = [0, 64], sizes = [8, 32], strides = [1, 1]} : vector<8x128xf32> to vector<8x32xf32>
    %267 = vector.extract_strided_slice %255 {offsets = [0, 96], sizes = [8, 32], strides = [1, 1]} : vector<8x128xf32> to vector<8x32xf32>
    %cst_76 = arith.constant 5.000000e-01 : f32
    %268 = vector.broadcast %cst_76 : f32 to vector<8x32xf32>
    %269 = arith.mulf %268, %267 : vector<8x32xf32>
    %cst_77 = arith.constant 5.000000e-01 : f32
    %270 = vector.broadcast %cst_77 : f32 to vector<8x32xf32>
    %271 = arith.addf %269, %270 : vector<8x32xf32>
    %272 = arith.mulf %265, %223 : vector<8x32xf32>
    %273 = arith.mulf %260, %266 : vector<8x32xf32>
    %274 = arith.addf %272, %273 : vector<8x32xf32>
    %275 = math.tanh %274 : vector<8x32xf32>
    %276 = arith.mulf %271, %275 : vector<8x32xf32>
    %277 = arith.addf %11, %252 : vector<8x128xf32>
    %278 = math.tanh %277 : vector<8x128xf32>
    %279 = vector.extract_strided_slice %278 {offsets = [0, 0], sizes = [8, 32], strides = [1, 1]} : vector<8x128xf32> to vector<8x32xf32>
    %cst_78 = arith.constant 5.000000e-01 : f32
    %280 = vector.broadcast %cst_78 : f32 to vector<8x32xf32>
    %281 = arith.mulf %280, %279 : vector<8x32xf32>
    %cst_79 = arith.constant 5.000000e-01 : f32
    %282 = vector.broadcast %cst_79 : f32 to vector<8x32xf32>
    %283 = arith.addf %281, %282 : vector<8x32xf32>
    %284 = vector.extract_strided_slice %278 {offsets = [0, 32], sizes = [8, 32], strides = [1, 1]} : vector<8x128xf32> to vector<8x32xf32>
    %cst_80 = arith.constant 5.000000e-01 : f32
    %285 = vector.broadcast %cst_80 : f32 to vector<8x32xf32>
    %286 = arith.mulf %285, %284 : vector<8x32xf32>
    %cst_81 = arith.constant 5.000000e-01 : f32
    %287 = vector.broadcast %cst_81 : f32 to vector<8x32xf32>
    %288 = arith.addf %286, %287 : vector<8x32xf32>
    %289 = vector.extract_strided_slice %278 {offsets = [0, 64], sizes = [8, 32], strides = [1, 1]} : vector<8x128xf32> to vector<8x32xf32>
    %290 = vector.extract_strided_slice %278 {offsets = [0, 96], sizes = [8, 32], strides = [1, 1]} : vector<8x128xf32> to vector<8x32xf32>
    %cst_82 = arith.constant 5.000000e-01 : f32
    %291 = vector.broadcast %cst_82 : f32 to vector<8x32xf32>
    %292 = arith.mulf %291, %290 : vector<8x32xf32>
    %cst_83 = arith.constant 5.000000e-01 : f32
    %293 = vector.broadcast %cst_83 : f32 to vector<8x32xf32>
    %294 = arith.addf %292, %293 : vector<8x32xf32>
    %295 = arith.mulf %288, %246 : vector<8x32xf32>
    %296 = arith.mulf %283, %289 : vector<8x32xf32>
    %297 = arith.addf %295, %296 : vector<8x32xf32>
    %298 = math.tanh %297 : vector<8x32xf32>
    %299 = arith.mulf %294, %298 : vector<8x32xf32>
    %300 = tpu.concatenate %299, %276 in 1 : vector<8x32xf32>, vector<8x32xf32> -> vector<8x64xf32>
    %301 = arith.truncf %300 : vector<8x64xf32> to vector<8x64xbf16>
    %cst_84 = arith.constant dense<0.000000e+00> : vector<8x256xf32>
    %302 = tpu.matmul %301, %14, %cst_84 {dimension_numbers = #tpu.dot_dimension_numbers<[1], [0], [0], [1], [0, 0, 1, 1], [], []>} : vector<8x64xbf16>, vector<64x256xbf16>, vector<8x256xf32> -> vector<8x256xf32>
    %303 = vector.extract_strided_slice %302 {offsets = [0, 128], sizes = [8, 128], strides = [1, 1]} : vector<8x256xf32> to vector<8x128xf32>
    %304 = vector.extract_strided_slice %302 {offsets = [0, 0], sizes = [8, 128], strides = [1, 1]} : vector<8x256xf32> to vector<8x128xf32>
    %305 = arith.addf %304, %17 : vector<8x128xf32>
    %306 = math.tanh %305 : vector<8x128xf32>
    %307 = vector.extract_strided_slice %306 {offsets = [0, 0], sizes = [8, 32], strides = [1, 1]} : vector<8x128xf32> to vector<8x32xf32>
    %cst_85 = arith.constant 5.000000e-01 : f32
    %308 = vector.broadcast %cst_85 : f32 to vector<8x32xf32>
    %309 = arith.mulf %308, %307 : vector<8x32xf32>
    %cst_86 = arith.constant 5.000000e-01 : f32
    %310 = vector.broadcast %cst_86 : f32 to vector<8x32xf32>
    %311 = arith.addf %309, %310 : vector<8x32xf32>
    %312 = vector.extract_strided_slice %306 {offsets = [0, 32], sizes = [8, 32], strides = [1, 1]} : vector<8x128xf32> to vector<8x32xf32>
    %cst_87 = arith.constant 5.000000e-01 : f32
    %313 = vector.broadcast %cst_87 : f32 to vector<8x32xf32>
    %314 = arith.mulf %313, %312 : vector<8x32xf32>
    %cst_88 = arith.constant 5.000000e-01 : f32
    %315 = vector.broadcast %cst_88 : f32 to vector<8x32xf32>
    %316 = arith.addf %314, %315 : vector<8x32xf32>
    %317 = vector.extract_strided_slice %306 {offsets = [0, 64], sizes = [8, 32], strides = [1, 1]} : vector<8x128xf32> to vector<8x32xf32>
    %318 = vector.extract_strided_slice %306 {offsets = [0, 96], sizes = [8, 32], strides = [1, 1]} : vector<8x128xf32> to vector<8x32xf32>
    %cst_89 = arith.constant 5.000000e-01 : f32
    %319 = vector.broadcast %cst_89 : f32 to vector<8x32xf32>
    %320 = arith.mulf %319, %318 : vector<8x32xf32>
    %cst_90 = arith.constant 5.000000e-01 : f32
    %321 = vector.broadcast %cst_90 : f32 to vector<8x32xf32>
    %322 = arith.addf %320, %321 : vector<8x32xf32>
    %323 = arith.mulf %316, %274 : vector<8x32xf32>
    %324 = arith.mulf %311, %317 : vector<8x32xf32>
    %325 = arith.addf %323, %324 : vector<8x32xf32>
    %326 = math.tanh %325 : vector<8x32xf32>
    %327 = arith.mulf %322, %326 : vector<8x32xf32>
    %328 = arith.addf %12, %303 : vector<8x128xf32>
    %329 = math.tanh %328 : vector<8x128xf32>
    %330 = vector.extract_strided_slice %329 {offsets = [0, 0], sizes = [8, 32], strides = [1, 1]} : vector<8x128xf32> to vector<8x32xf32>
    %cst_91 = arith.constant 5.000000e-01 : f32
    %331 = vector.broadcast %cst_91 : f32 to vector<8x32xf32>
    %332 = arith.mulf %331, %330 : vector<8x32xf32>
    %cst_92 = arith.constant 5.000000e-01 : f32
    %333 = vector.broadcast %cst_92 : f32 to vector<8x32xf32>
    %334 = arith.addf %332, %333 : vector<8x32xf32>
    %335 = vector.extract_strided_slice %329 {offsets = [0, 32], sizes = [8, 32], strides = [1, 1]} : vector<8x128xf32> to vector<8x32xf32>
    %cst_93 = arith.constant 5.000000e-01 : f32
    %336 = vector.broadcast %cst_93 : f32 to vector<8x32xf32>
    %337 = arith.mulf %336, %335 : vector<8x32xf32>
    %cst_94 = arith.constant 5.000000e-01 : f32
    %338 = vector.broadcast %cst_94 : f32 to vector<8x32xf32>
    %339 = arith.addf %337, %338 : vector<8x32xf32>
    %340 = vector.extract_strided_slice %329 {offsets = [0, 64], sizes = [8, 32], strides = [1, 1]} : vector<8x128xf32> to vector<8x32xf32>
    %341 = vector.extract_strided_slice %329 {offsets = [0, 96], sizes = [8, 32], strides = [1, 1]} : vector<8x128xf32> to vector<8x32xf32>
    %cst_95 = arith.constant 5.000000e-01 : f32
    %342 = vector.broadcast %cst_95 : f32 to vector<8x32xf32>
    %343 = arith.mulf %342, %341 : vector<8x32xf32>
    %cst_96 = arith.constant 5.000000e-01 : f32
    %344 = vector.broadcast %cst_96 : f32 to vector<8x32xf32>
    %345 = arith.addf %343, %344 : vector<8x32xf32>
    %346 = arith.mulf %339, %297 : vector<8x32xf32>
    %347 = arith.mulf %334, %340 : vector<8x32xf32>
    %348 = arith.addf %346, %347 : vector<8x32xf32>
    %349 = math.tanh %348 : vector<8x32xf32>
    %350 = arith.mulf %345, %349 : vector<8x32xf32>
    %351 = tpu.concatenate %350, %327 in 1 : vector<8x32xf32>, vector<8x32xf32> -> vector<8x64xf32>
    %352 = arith.truncf %351 : vector<8x64xf32> to vector<8x64xbf16>
    %cst_97 = arith.constant dense<0.000000e+00> : vector<8x256xf32>
    %353 = tpu.matmul %352, %14, %cst_97 {dimension_numbers = #tpu.dot_dimension_numbers<[1], [0], [0], [1], [0, 0, 1, 1], [], []>} : vector<8x64xbf16>, vector<64x256xbf16>, vector<8x256xf32> -> vector<8x256xf32>
    %354 = vector.extract_strided_slice %353 {offsets = [0, 128], sizes = [8, 128], strides = [1, 1]} : vector<8x256xf32> to vector<8x128xf32>
    %355 = vector.extract_strided_slice %353 {offsets = [0, 0], sizes = [8, 128], strides = [1, 1]} : vector<8x256xf32> to vector<8x128xf32>
    %356 = arith.addf %355, %17 : vector<8x128xf32>
    %357 = math.tanh %356 : vector<8x128xf32>
    %358 = vector.extract_strided_slice %357 {offsets = [0, 0], sizes = [8, 32], strides = [1, 1]} : vector<8x128xf32> to vector<8x32xf32>
    %cst_98 = arith.constant 5.000000e-01 : f32
    %359 = vector.broadcast %cst_98 : f32 to vector<8x32xf32>
    %360 = arith.mulf %359, %358 : vector<8x32xf32>
    %cst_99 = arith.constant 5.000000e-01 : f32
    %361 = vector.broadcast %cst_99 : f32 to vector<8x32xf32>
    %362 = arith.addf %360, %361 : vector<8x32xf32>
    %363 = vector.extract_strided_slice %357 {offsets = [0, 32], sizes = [8, 32], strides = [1, 1]} : vector<8x128xf32> to vector<8x32xf32>
    %cst_100 = arith.constant 5.000000e-01 : f32
    %364 = vector.broadcast %cst_100 : f32 to vector<8x32xf32>
    %365 = arith.mulf %364, %363 : vector<8x32xf32>
    %cst_101 = arith.constant 5.000000e-01 : f32
    %366 = vector.broadcast %cst_101 : f32 to vector<8x32xf32>
    %367 = arith.addf %365, %366 : vector<8x32xf32>
    %368 = vector.extract_strided_slice %357 {offsets = [0, 64], sizes = [8, 32], strides = [1, 1]} : vector<8x128xf32> to vector<8x32xf32>
    %369 = vector.extract_strided_slice %357 {offsets = [0, 96], sizes = [8, 32], strides = [1, 1]} : vector<8x128xf32> to vector<8x32xf32>
    %cst_102 = arith.constant 5.000000e-01 : f32
    %370 = vector.broadcast %cst_102 : f32 to vector<8x32xf32>
    %371 = arith.mulf %370, %369 : vector<8x32xf32>
    %cst_103 = arith.constant 5.000000e-01 : f32
    %372 = vector.broadcast %cst_103 : f32 to vector<8x32xf32>
    %373 = arith.addf %371, %372 : vector<8x32xf32>
    %374 = arith.mulf %367, %325 : vector<8x32xf32>
    %375 = arith.mulf %362, %368 : vector<8x32xf32>
    %376 = arith.addf %374, %375 : vector<8x32xf32>
    %377 = math.tanh %376 : vector<8x32xf32>
    %378 = arith.mulf %373, %377 : vector<8x32xf32>
    %379 = arith.addf %13, %354 : vector<8x128xf32>
    %380 = math.tanh %379 : vector<8x128xf32>
    %381 = vector.extract_strided_slice %380 {offsets = [0, 0], sizes = [8, 32], strides = [1, 1]} : vector<8x128xf32> to vector<8x32xf32>
    %cst_104 = arith.constant 5.000000e-01 : f32
    %382 = vector.broadcast %cst_104 : f32 to vector<8x32xf32>
    %383 = arith.mulf %382, %381 : vector<8x32xf32>
    %cst_105 = arith.constant 5.000000e-01 : f32
    %384 = vector.broadcast %cst_105 : f32 to vector<8x32xf32>
    %385 = arith.addf %383, %384 : vector<8x32xf32>
    %386 = vector.extract_strided_slice %380 {offsets = [0, 32], sizes = [8, 32], strides = [1, 1]} : vector<8x128xf32> to vector<8x32xf32>
    %cst_106 = arith.constant 5.000000e-01 : f32
    %387 = vector.broadcast %cst_106 : f32 to vector<8x32xf32>
    %388 = arith.mulf %387, %386 : vector<8x32xf32>
    %cst_107 = arith.constant 5.000000e-01 : f32
    %389 = vector.broadcast %cst_107 : f32 to vector<8x32xf32>
    %390 = arith.addf %388, %389 : vector<8x32xf32>
    %391 = vector.extract_strided_slice %380 {offsets = [0, 64], sizes = [8, 32], strides = [1, 1]} : vector<8x128xf32> to vector<8x32xf32>
    %392 = vector.extract_strided_slice %380 {offsets = [0, 96], sizes = [8, 32], strides = [1, 1]} : vector<8x128xf32> to vector<8x32xf32>
    %cst_108 = arith.constant 5.000000e-01 : f32
    %393 = vector.broadcast %cst_108 : f32 to vector<8x32xf32>
    %394 = arith.mulf %393, %392 : vector<8x32xf32>
    %cst_109 = arith.constant 5.000000e-01 : f32
    %395 = vector.broadcast %cst_109 : f32 to vector<8x32xf32>
    %396 = arith.addf %394, %395 : vector<8x32xf32>
    %397 = arith.mulf %390, %348 : vector<8x32xf32>
    %398 = arith.mulf %385, %391 : vector<8x32xf32>
    %399 = arith.addf %397, %398 : vector<8x32xf32>
    %400 = math.tanh %399 : vector<8x32xf32>
    %401 = arith.mulf %396, %400 : vector<8x32xf32>
    %402 = tpu.concatenate %401, %378 in 1 : vector<8x32xf32>, vector<8x32xf32> -> vector<8x64xf32>
    %403 = arith.truncf %402 : vector<8x64xf32> to vector<8x64xbf16>
    %cst_110 = arith.constant dense<0.000000e+00> : vector<8x256xf32>
    %404 = tpu.matmul %403, %14, %cst_110 {dimension_numbers = #tpu.dot_dimension_numbers<[1], [0], [0], [1], [0, 0, 1, 1], [], []>} : vector<8x64xbf16>, vector<64x256xbf16>, vector<8x256xf32> -> vector<8x256xf32>
    %405 = vector.extract_strided_slice %404 {offsets = [0, 0], sizes = [8, 128], strides = [1, 1]} : vector<8x256xf32> to vector<8x128xf32>
    %406 = arith.addf %405, %17 : vector<8x128xf32>
    %407 = math.tanh %406 : vector<8x128xf32>
    %408 = vector.extract_strided_slice %407 {offsets = [0, 0], sizes = [8, 32], strides = [1, 1]} : vector<8x128xf32> to vector<8x32xf32>
    %cst_111 = arith.constant 5.000000e-01 : f32
    %409 = vector.broadcast %cst_111 : f32 to vector<8x32xf32>
    %410 = arith.mulf %409, %408 : vector<8x32xf32>
    %cst_112 = arith.constant 5.000000e-01 : f32
    %411 = vector.broadcast %cst_112 : f32 to vector<8x32xf32>
    %412 = arith.addf %410, %411 : vector<8x32xf32>
    %413 = vector.extract_strided_slice %407 {offsets = [0, 32], sizes = [8, 32], strides = [1, 1]} : vector<8x128xf32> to vector<8x32xf32>
    %cst_113 = arith.constant 5.000000e-01 : f32
    %414 = vector.broadcast %cst_113 : f32 to vector<8x32xf32>
    %415 = arith.mulf %414, %413 : vector<8x32xf32>
    %cst_114 = arith.constant 5.000000e-01 : f32
    %416 = vector.broadcast %cst_114 : f32 to vector<8x32xf32>
    %417 = arith.addf %415, %416 : vector<8x32xf32>
    %418 = vector.extract_strided_slice %407 {offsets = [0, 64], sizes = [8, 32], strides = [1, 1]} : vector<8x128xf32> to vector<8x32xf32>
    %419 = vector.extract_strided_slice %407 {offsets = [0, 96], sizes = [8, 32], strides = [1, 1]} : vector<8x128xf32> to vector<8x32xf32>
    %cst_115 = arith.constant 5.000000e-01 : f32
    %420 = vector.broadcast %cst_115 : f32 to vector<8x32xf32>
    %421 = arith.mulf %420, %419 : vector<8x32xf32>
    %cst_116 = arith.constant 5.000000e-01 : f32
    %422 = vector.broadcast %cst_116 : f32 to vector<8x32xf32>
    %423 = arith.addf %421, %422 : vector<8x32xf32>
    %424 = arith.mulf %417, %376 : vector<8x32xf32>
    %425 = arith.mulf %412, %418 : vector<8x32xf32>
    %426 = arith.addf %424, %425 : vector<8x32xf32>
    %427 = math.tanh %426 : vector<8x32xf32>
    %428 = arith.mulf %423, %427 : vector<8x32xf32>
    %c0_117 = arith.constant 0 : index
    %c0_118 = arith.constant 0 : index
    %429 = vector.load %arg5[%c0_117, %c0_118] : memref<8x32xf32, #tpu.memory_space<vmem>>, vector<8x32xf32>
    tpu.vector_store %arg5[%c0_117, %c0_118], %428 {strides = array<i32>} : memref<8x32xf32, #tpu.memory_space<vmem>>, vector<8x32xf32>,
    return
  }
}

</mosaic_0001>

<llo_original>
// kernel: encoder_forward.1
$region0: #{encoder_forward.1}
  #allocation0 [shape = 'u32[]', space=smem, size = 0x4, offset = 0x4, fixed_abs, tag = 'smem constant byte address 0x4 - core index']
  #allocation1 [shape = 'u32[144,128]{1,0:T(1,128)}', space=vmem, size = 0x12000, scoped, tag = 'internal scratch']
  %s0 = inlined_call_operand.vmem [shape: f32[64,8], index: 0, kind: input, shape index: {}]
  %s1 = inlined_call_operand.vmem [shape: f32[8,128], index: 1, kind: input, shape index: {}]
  %s2 = inlined_call_operand.vmem [shape: f32[1,128], index: 2, kind: input, shape index: {}]
  %s3 = inlined_call_operand.vmem [shape: bf16[64,256], index: 3, kind: input, shape index: {}]
  %s4 = inlined_call_operand.vmem [shape: f32[1,128], index: 4, kind: input, shape index: {}]
  %s5 = inlined_call_operand.vmem [shape: f32[8,32], index: 5, kind: output, shape index: {}]
  %s6 = sld [smem:[#allocation0]]
  $region30: #{encoder_forward.1} parent=0
    _
  %s8 = ssub.s32 1, %s6
  %s9 = scalar_select 0, %s8, %s6
  // Predicated region
  $region2: #{encoder_forward.1} parent=0 // pred_check
    _
  $region3: #{encoder_forward.1} parent=0 // pred_check_branch
    %11 = sbr.rel (0) target = $region5
  $region4: #{encoder_forward.1} parent=0 // pred_region
    _
  $region5: #{encoder_forward.1} parent=0 // pred_fallthru
    _
  // Predicated region
  $region6: #{encoder_forward.1} parent=0 // pred_check
    _
  $region7: #{encoder_forward.1} parent=0 // pred_check_branch
    %13 = sbr.rel (0) target = $region9
  $region8: #{encoder_forward.1} parent=0 // pred_region
    _
  $region9: #{encoder_forward.1} parent=0 // pred_fallthru
    _
  // Predicated region
  $region10: #{encoder_forward.1} parent=0 // pred_check
    _
  $region11: #{encoder_forward.1} parent=0 // pred_check_branch
    %15 = sbr.rel (0) target = $region13
  $region12: #{encoder_forward.1} parent=0 // pred_region
    _
  $region13: #{encoder_forward.1} parent=0 // pred_fallthru
    _
  // Predicated region
  $region14: #{encoder_forward.1} parent=0 // pred_check
    _
  $region15: #{encoder_forward.1} parent=0 // pred_check_branch
    %17 = sbr.rel (0) target = $region17
  $region16: #{encoder_forward.1} parent=0 // pred_region
    _
  $region17: #{encoder_forward.1} parent=0 // pred_fallthru
    _
  // Predicated region
  $region18: #{encoder_forward.1} parent=0 // pred_check
    _
  $region19: #{encoder_forward.1} parent=0 // pred_check_branch
    %19 = sbr.rel (0) target = $region21
  $region20: #{encoder_forward.1} parent=0 // pred_region
    _
  $region21: #{encoder_forward.1} parent=0 // pred_fallthru
    _
  %v21 = vld [vmem:[%s0] sm:$0xff]
  %v22 = vld [vmem:[%s0 + $0x8] sm:$0xff]
  %v23 = vld [vmem:[%s0 + $0x10] sm:$0xff]
  %v24 = vld [vmem:[%s0 + $0x18] sm:$0xff]
  %v25 = vld [vmem:[%s0 + $0x20] sm:$0xff]
  %v26 = vld [vmem:[%s0 + $0x28] sm:$0xff]
  %v27 = vld [vmem:[%s0 + $0x30] sm:$0xff]
  %v28 = vld [vmem:[%s0 + $0x38] sm:$0xff]
  %v29 = vld [vmem:[%s1] sm:$0xff]
  %v30 = vld [vmem:[%s2] sm:$0x1]
  %v32 = vlaneseq
  %v33 = vshrl.u32 %v32, 7
  %v34 = vsub.s32 0, %v33
  %v35 = vrot.slane %v30, %v34
  %vm37 = vcmask 64512
  %v39 = vsel %vm37, %v21, 0
  %v42 = vsel %vm37, %v22, 0
  %v45 = vsel %vm37, %v23, 0
  %v48 = vsel %vm37, %v24, 0
  %v51 = vsel %vm37, %v25, 0
  %v54 = vsel %vm37, %v26, 0
  %v57 = vsel %vm37, %v27, 0
  %v60 = vsel %vm37, %v28, 0
  %62 = vmatprep.subr.mxu0 0.0
  %63 = vmatpush1.msra.mxu0 0.0
  %64 = vmatprep.subr.mxu0 0.0
  %65 = vmatpush1.msra.mxu0 0.0
  %66 = vmatprep.subr.mxu0 0.0
  %67 = vmatpush1.msra.mxu0 0.0
  %68 = vmatprep.subr.mxu0 0.0
  %69 = vmatpush1.msra.mxu0 0.0
  %70 = vmatprep.subr.mxu0 0.0
  %71 = vmatpush1.msra.mxu0 0.0
  %72 = vmatprep.subr.mxu0 0.0
  %73 = vmatpush1.msra.mxu0 0.0
  %74 = vmatprep.subr.mxu0 0.0
  %75 = vmatpush1.msra.mxu0 0.0
  %76 = vmatprep.subr.mxu0 0.0
  %77 = vmatpush1.msra.mxu0 0.0
  %78 = vmatprep.subr.mxu0 0.0
  %79 = vmatpush1.msra.mxu0 0.0
  %80 = vmatprep.subr.mxu0 0.0
  %81 = vmatpush1.msra.mxu0 0.0
  %82 = vmatprep.subr.mxu0 0.0
  %83 = vmatpush1.msra.mxu0 0.0
  %84 = vmatprep.subr.mxu0 0.0
  %85 = vmatpush1.msra.mxu0 0.0
  %86 = vmatprep.subr.mxu0 0.0
  %87 = vmatpush1.msra.mxu0 0.0
  %88 = vmatprep.subr.mxu0 0.0
  %89 = vmatpush1.msra.mxu0 0.0
  %90 = vmatprep.subr.mxu0 0.0
  %91 = vmatpush1.msra.mxu0 0.0
  %92 = vmatprep.subr.mxu0 0.0
  %93 = vmatpush1.msra.mxu0 %v29
  %94 = vmatprep.subr.mxu0 0.0
  %95 = vmatpush2.msra.mxu0 0.0
  %96 = vmatprep.subr.mxu0 0.0
  %97 = vmatpush2.msra.mxu0 0.0
  %98 = vmatprep.subr.mxu0 0.0
  %99 = vmatpush2.msra.mxu0 0.0
  %100 = vmatprep.subr.mxu0 0.0
  %101 = vmatpush2.msra.mxu0 0.0
  %102 = vmatprep.subr.mxu0 0.0
  %103 = vmatpush2.msra.mxu0 0.0
  %104 = vmatprep.subr.mxu0 0.0
  %105 = vmatpush2.msra.mxu0 0.0
  %106 = vmatprep.subr.mxu0 0.0
  %107 = vmatpush2.msra.mxu0 0.0
  %108 = vmatprep.subr.mxu0 0.0
  %109 = vmatpush2.msra.mxu0 0.0
  %110 = vmatprep.subr.mxu0 0.0
  %111 = vmatpush2.msra.mxu0 0.0
  %112 = vmatprep.subr.mxu0 0.0
  %113 = vmatpush2.msra.mxu0 0.0
  %114 = vmatprep.subr.mxu0 0.0
  %115 = vmatpush2.msra.mxu0 0.0
  %116 = vmatprep.subr.mxu0 0.0
  %117 = vmatpush2.msra.mxu0 0.0
  %118 = vmatprep.subr.mxu0 0.0
  %119 = vmatpush2.msra.mxu0 0.0
  %120 = vmatprep.subr.mxu0 0.0
  %121 = vmatpush2.msra.mxu0 0.0
  %122 = vmatprep.subr.mxu0 0.0
  %123 = vmatpush2.msra.mxu0 0.0
  %124 = vmatprep.subr.mxu0 0.0
  %125 = vmatpush2.msra.mxu0 0.0
  %126 = vmatprep.mubr.f32.mxu0 0.0
  %127 = vmatmul.mubr.f32.gmra.mxu0 %v39
  %v128 = vpop.f32.mrf.mxu0
  %v129 = vadd.f32 %v35, %v128
  %v130 = vpop.f32.mrf.mxu0
  %131 = vmatprep.mubr.f32.mxu0 0.0
  %132 = vmatmul.mubr.f32.gmra.mxu0 %v42
  %v133 = vpop.f32.mrf.mxu0
  %v134 = vadd.f32 %v35, %v133
  %v135 = vpop.f32.mrf.mxu0
  %136 = vmatprep.mubr.f32.mxu0 0.0
  %137 = vmatmul.mubr.f32.gmra.mxu0 %v45
  %v138 = vpop.f32.mrf.mxu0
  %v139 = vadd.f32 %v35, %v138
  %v140 = vpop.f32.mrf.mxu0
  %141 = vmatprep.mubr.f32.mxu0 0.0
  %142 = vmatmul.mubr.f32.gmra.mxu0 %v48
  %v143 = vpop.f32.mrf.mxu0
  %v144 = vadd.f32 %v35, %v143
  %v145 = vpop.f32.mrf.mxu0
  %146 = vmatprep.mubr.f32.mxu0 0.0
  %147 = vmatmul.mubr.f32.gmra.mxu0 %v51
  %v148 = vpop.f32.mrf.mxu0
  %v149 = vadd.f32 %v35, %v148
  %v150 = vpop.f32.mrf.mxu0
  %151 = vmatprep.mubr.f32.mxu0 0.0
  %152 = vmatmul.mubr.f32.gmra.mxu0 %v54
  %v153 = vpop.f32.mrf.mxu0
  %v154 = vadd.f32 %v35, %v153
  %v155 = vpop.f32.mrf.mxu0
  %156 = vmatprep.mubr.f32.mxu0 0.0
  %157 = vmatmul.mubr.f32.gmra.mxu0 %v57
  %v158 = vpop.f32.mrf.mxu0
  %v159 = vadd.f32 %v35, %v158
  %v160 = vpop.f32.mrf.mxu0
  %161 = vmatprep.mubr.f32.mxu0 0.0
  %162 = vmatmul.mubr.f32.gmra.mxu0 %v60
  %v163 = vpop.f32.mrf.mxu0
  %v164 = vadd.f32 %v35, %v163
  %v165 = vpop.f32.mrf.mxu0
  %166 = vdwg.mxu0
  %v167 = vld [vmem:[%s3] sm:$0xff]
  %v168 = vld [vmem:[%s3 + $0x8] sm:$0xff]
  %v169 = vld [vmem:[%s3 + $0x10] sm:$0xff]
  %v170 = vld [vmem:[%s3 + $0x18] sm:$0xff]
  %v171 = vld [vmem:[%s3 + $0x20] sm:$0xff]
  %v172 = vld [vmem:[%s3 + $0x28] sm:$0xff]
  %v173 = vld [vmem:[%s3 + $0x30] sm:$0xff]
  %v174 = vld [vmem:[%s3 + $0x38] sm:$0xff]
  %v175 = vld [vmem:[%s4] sm:$0x1]
  %v177 = vlaneseq
  %v178 = vshrl.u32 %v177, 7
  %v179 = vsub.s32 0, %v178
  %v180 = vrot.slane %v175, %v179
  %v182 = vadd.f32 %v129, 0.0
  %v183 = vtanh.pop %v182
  %v184 = vmul.f32 %v183, 0.5
  %v185 = vadd.f32 %v184, 0.5
  %v186 = vmul.f32 %v185, 0.0
  %188 = vrot.lane.b32.xlu0 %v183, 64
  %v189 = vpop.permute.xlu0 %188
  %v191 = vmul.f32 %v185, %v189
  %193 = vrot.lane.b32.xlu0 %v191, 32
  %v194 = vpop.permute.xlu0 %193
  %v196 = vadd.f32 %v186, %v194
  %v197 = vtanh.pop %v196
  %199 = vrot.lane.b32.xlu0 %v197, 64
  %v200 = vpop.permute.xlu0 %199
  %v202 = vmul.f32 %v185, %v200
  %204 = vrot.lane.b32.xlu0 %v202, 32
  %v205 = vpop.permute.xlu0 %204
  %vm207 = vcmask 261120
  %v208 = vsel %vm207, %v205, 0.0
  %v209 = vpack.c.bf16 %v208, %v208
  %v218 = vunpack.c.l.b16 %v167
  %v219 = vunpack.c.h.b16 %v167
  %v220 = vunpack.c.l.b16 %v168
  %v221 = vunpack.c.h.b16 %v168
  %v222 = vunpack.c.l.b16 %v169
  %v223 = vunpack.c.h.b16 %v169
  %v224 = vunpack.c.l.b16 %v170
  %v225 = vunpack.c.h.b16 %v170
  %v226 = vunpack.c.l.b16 %v171
  %v227 = vunpack.c.h.b16 %v171
  %v228 = vunpack.c.l.b16 %v172
  %v229 = vunpack.c.h.b16 %v172
  %v230 = vunpack.c.l.b16 %v173
  %v231 = vunpack.c.h.b16 %v173
  %v232 = vunpack.c.l.b16 %v174
  %v233 = vunpack.c.h.b16 %v174
  %v234 = vpack.c.b16 %v220, %v218
  %v235 = vpack.c.b16 %v221, %v219
  %v236 = vpack.c.b16 %v224, %v222
  %v237 = vpack.c.b16 %v225, %v223
  %v238 = vpack.c.b16 %v228, %v226
  %v239 = vpack.c.b16 %v229, %v227
  %v240 = vpack.c.b16 %v232, %v230
  %v241 = vpack.c.b16 %v233, %v231
  %vm250 = vcmask 523264
  %v252 = vsel %vm250, %v209, 0
  %254 = vmatprep.subr.bf16.mxu0 0
  %255 = vmatpush1.bf16.msra.mxu0 0
  %256 = vmatprep.subr.bf16.mxu0 0
  %257 = vmatpush1.bf16.msra.mxu0 0
  %258 = vmatprep.subr.bf16.mxu0 0
  %259 = vmatpush1.bf16.msra.mxu0 0
  %260 = vmatprep.subr.bf16.mxu0 0
  %261 = vmatpush1.bf16.msra.mxu0 0
  %262 = vmatprep.subr.bf16.mxu0 %v241
  %263 = vmatpush1.bf16.msra.mxu0 %v240
  %264 = vmatprep.subr.bf16.mxu0 %v239
  %265 = vmatpush1.bf16.msra.mxu0 %v238
  %266 = vmatprep.subr.bf16.mxu0 %v237
  %267 = vmatpush1.bf16.msra.mxu0 %v236
  %268 = vmatprep.subr.bf16.mxu0 %v235
  %269 = vmatpush1.bf16.msra.mxu0 %v234
  %270 = vmatprep.subr.bf16.mxu0 0
  %271 = vmatpush2.bf16.msra.mxu0 0
  %272 = vmatprep.subr.bf16.mxu0 0
  %273 = vmatpush2.bf16.msra.mxu0 0
  %274 = vmatprep.subr.bf16.mxu0 0
  %275 = vmatpush2.bf16.msra.mxu0 0
  %276 = vmatprep.subr.bf16.mxu0 0
  %277 = vmatpush2.bf16.msra.mxu0 0
  %278 = vmatprep.subr.bf16.mxu0 0
  %279 = vmatpush2.bf16.msra.mxu0 0
  %280 = vmatprep.subr.bf16.mxu0 0
  %281 = vmatpush2.bf16.msra.mxu0 0
  %282 = vmatprep.subr.bf16.mxu0 0
  %283 = vmatpush2.bf16.msra.mxu0 0
  %284 = vmatprep.subr.bf16.mxu0 0
  %285 = vmatpush2.bf16.msra.mxu0 0
  %286 = vmatprep.mubr.bf16.mxu0 0
  %287 = vmatmul.mubr.bf16.gmra.mxu0 %v252
  %v288 = vpop.f32.mrf.mxu0
  %v289 = vadd.f32 0.0, %v288
  %v290 = vpop.f32.mrf.mxu0
  %v291 = vadd.f32 0.0, %v290
  %v292 = vpop.f32.mrf.mxu0
  %v293 = vpop.f32.mrf.mxu0
  %294 = vdwg.mxu0
  %v295 = vadd.f32 %v289, %v180
  %v296 = vtanh.pop %v295
  %v297 = vmul.f32 %v296, 0.5
  %v298 = vadd.f32 %v297, 0.5
  %v299 = vmul.f32 %v298, 0.0
  %301 = vrot.lane.b32.xlu0 %v296, 64
  %v302 = vpop.permute.xlu0 %301
  %v304 = vmul.f32 %v298, %v302
  %306 = vrot.lane.b32.xlu0 %v304, 32
  %v307 = vpop.permute.xlu0 %306
  %v309 = vadd.f32 %v299, %v307
  %v310 = vtanh.pop %v309
  %312 = vrot.lane.b32.xlu0 %v310, 64
  %v313 = vpop.permute.xlu0 %312
  %v315 = vmul.f32 %v298, %v313
  %v316 = vadd.f32 %v134, %v291
  %v317 = vtanh.pop %v316
  %v318 = vmul.f32 %v317, 0.5
  %v319 = vadd.f32 %v318, 0.5
  %v320 = vmul.f32 %v319, %v196
  %322 = vrot.lane.b32.xlu0 %v317, 64
  %v323 = vpop.permute.xlu0 %322
  %v325 = vmul.f32 %v319, %v323
  %327 = vrot.lane.b32.xlu0 %v325, 32
  %v328 = vpop.permute.xlu0 %327
  %v330 = vadd.f32 %v320, %v328
  %v331 = vtanh.pop %v330
  %333 = vrot.lane.b32.xlu0 %v331, 64
  %v334 = vpop.permute.xlu0 %333
  %v336 = vmul.f32 %v319, %v334
  %338 = vrot.lane.b32.xlu0 %v336, 32
  %v339 = vpop.permute.xlu0 %338
  %342 = vrot.lane.b32.xlu0 %v315, 64
  %v343 = vpop.permute.xlu0 %342
  %v345 = vsel %vm207, %v339, %v343
  %v346 = vpack.c.bf16 %v345, %v345
  %v348 = vsel %vm250, %v346, 0
  %350 = vmatprep.subr.bf16.mxu0 0
  %351 = vmatpush1.bf16.msra.mxu0 0
  %352 = vmatprep.subr.bf16.mxu0 0
  %353 = vmatpush1.bf16.msra.mxu0 0
  %354 = vmatprep.subr.bf16.mxu0 0
  %355 = vmatpush1.bf16.msra.mxu0 0
  %356 = vmatprep.subr.bf16.mxu0 0
  %357 = vmatpush1.bf16.msra.mxu0 0
  %358 = vmatprep.subr.bf16.mxu0 %v241
  %359 = vmatpush1.bf16.msra.mxu0 %v240
  %360 = vmatprep.subr.bf16.mxu0 %v239
  %361 = vmatpush1.bf16.msra.mxu0 %v238
  %362 = vmatprep.subr.bf16.mxu0 %v237
  %363 = vmatpush1.bf16.msra.mxu0 %v236
  %364 = vmatprep.subr.bf16.mxu0 %v235
  %365 = vmatpush1.bf16.msra.mxu0 %v234
  %366 = vmatprep.subr.bf16.mxu0 0
  %367 = vmatpush2.bf16.msra.mxu0 0
  %368 = vmatprep.subr.bf16.mxu0 0
  %369 = vmatpush2.bf16.msra.mxu0 0
  %370 = vmatprep.subr.bf16.mxu0 0
  %371 = vmatpush2.bf16.msra.mxu0 0
  %372 = vmatprep.subr.bf16.mxu0 0
  %373 = vmatpush2.bf16.msra.mxu0 0
  %374 = vmatprep.subr.bf16.mxu0 0
  %375 = vmatpush2.bf16.msra.mxu0 0
  %376 = vmatprep.subr.bf16.mxu0 0
  %377 = vmatpush2.bf16.msra.mxu0 0
  %378 = vmatprep.subr.bf16.mxu0 0
  %379 = vmatpush2.bf16.msra.mxu0 0
  %380 = vmatprep.subr.bf16.mxu0 0
  %381 = vmatpush2.bf16.msra.mxu0 0
  %382 = vmatprep.mubr.bf16.mxu0 0
  %383 = vmatmul.mubr.bf16.gmra.mxu0 %v348
  %v384 = vpop.f32.mrf.mxu0
  %v385 = vadd.f32 0.0, %v384
  %v386 = vpop.f32.mrf.mxu0
  %v387 = vadd.f32 0.0, %v386
  %v388 = vpop.f32.mrf.mxu0
  %v389 = vpop.f32.mrf.mxu0
  %390 = vdwg.mxu0
  %v391 = vadd.f32 %v385, %v180
  %v392 = vtanh.pop %v391
  %v393 = vmul.f32 %v392, 0.5
  %v394 = vadd.f32 %v393, 0.5
  %v395 = vmul.f32 %v394, %v309
  %397 = vrot.lane.b32.xlu0 %v392, 64
  %v398 = vpop.permute.xlu0 %397
  %v400 = vmul.f32 %v394, %v398
  %402 = vrot.lane.b32.xlu0 %v400, 32
  %v403 = vpop.permute.xlu0 %402
  %v405 = vadd.f32 %v395, %v403
  %v406 = vtanh.pop %v405
  %408 = vrot.lane.b32.xlu0 %v406, 64
  %v409 = vpop.permute.xlu0 %408
  %v411 = vmul.f32 %v394, %v409
  %v412 = vadd.f32 %v139, %v387
  %v413 = vtanh.pop %v412
  %v414 = vmul.f32 %v413, 0.5
  %v415 = vadd.f32 %v414, 0.5
  %v416 = vmul.f32 %v415, %v330
  %418 = vrot.lane.b32.xlu0 %v413, 64
  %v419 = vpop.permute.xlu0 %418
  %v421 = vmul.f32 %v415, %v419
  %423 = vrot.lane.b32.xlu0 %v421, 32
  %v424 = vpop.permute.xlu0 %423
  %v426 = vadd.f32 %v416, %v424
  %v427 = vtanh.pop %v426
  %429 = vrot.lane.b32.xlu0 %v427, 64
  %v430 = vpop.permute.xlu0 %429
  %v432 = vmul.f32 %v415, %v430
  %434 = vrot.lane.b32.xlu0 %v432, 32
  %v435 = vpop.permute.xlu0 %434
  %438 = vrot.lane.b32.xlu0 %v411, 64
  %v439 = vpop.permute.xlu0 %438
  %v441 = vsel %vm207, %v435, %v439
  %v442 = vpack.c.bf16 %v441, %v441
  %v444 = vsel %vm250, %v442, 0
  %446 = vmatprep.subr.bf16.mxu0 0
  %447 = vmatpush1.bf16.msra.mxu0 0
  %448 = vmatprep.subr.bf16.mxu0 0
  %449 = vmatpush1.bf16.msra.mxu0 0
  %450 = vmatprep.subr.bf16.mxu0 0
  %451 = vmatpush1.bf16.msra.mxu0 0
  %452 = vmatprep.subr.bf16.mxu0 0
  %453 = vmatpush1.bf16.msra.mxu0 0
  %454 = vmatprep.subr.bf16.mxu0 %v241
  %455 = vmatpush1.bf16.msra.mxu0 %v240
  %456 = vmatprep.subr.bf16.mxu0 %v239
  %457 = vmatpush1.bf16.msra.mxu0 %v238
  %458 = vmatprep.subr.bf16.mxu0 %v237
  %459 = vmatpush1.bf16.msra.mxu0 %v236
  %460 = vmatprep.subr.bf16.mxu0 %v235
  %461 = vmatpush1.bf16.msra.mxu0 %v234
  %462 = vmatprep.subr.bf16.mxu0 0
  %463 = vmatpush2.bf16.msra.mxu0 0
  %464 = vmatprep.subr.bf16.mxu0 0
  %465 = vmatpush2.bf16.msra.mxu0 0
  %466 = vmatprep.subr.bf16.mxu0 0
  %467 = vmatpush2.bf16.msra.mxu0 0
  %468 = vmatprep.subr.bf16.mxu0 0
  %469 = vmatpush2.bf16.msra.mxu0 0
  %470 = vmatprep.subr.bf16.mxu0 0
  %471 = vmatpush2.bf16.msra.mxu0 0
  %472 = vmatprep.subr.bf16.mxu0 0
  %473 = vmatpush2.bf16.msra.mxu0 0
  %474 = vmatprep.subr.bf16.mxu0 0
  %475 = vmatpush2.bf16.msra.mxu0 0
  %476 = vmatprep.subr.bf16.mxu0 0
  %477 = vmatpush2.bf16.msra.mxu0 0
  %478 = vmatprep.mubr.bf16.mxu0 0
  %479 = vmatmul.mubr.bf16.gmra.mxu0 %v444
  %v480 = vpop.f32.mrf.mxu0
  %v481 = vadd.f32 0.0, %v480
  %v482 = vpop.f32.mrf.mxu0
  %v483 = vadd.f32 0.0, %v482
  %v484 = vpop.f32.mrf.mxu0
  %v485 = vpop.f32.mrf.mxu0
  %486 = vdwg.mxu0
  %v487 = vadd.f32 %v481, %v180
  %v488 = vtanh.pop %v487
  %v489 = vmul.f32 %v488, 0.5
  %v490 = vadd.f32 %v489, 0.5
  %v491 = vmul.f32 %v490, %v405
  %493 = vrot.lane.b32.xlu0 %v488, 64
  %v494 = vpop.permute.xlu0 %493
  %v496 = vmul.f32 %v490, %v494
  %498 = vrot.lane.b32.xlu0 %v496, 32
  %v499 = vpop.permute.xlu0 %498
  %v501 = vadd.f32 %v491, %v499
  %v502 = vtanh.pop %v501
  %504 = vrot.lane.b32.xlu0 %v502, 64
  %v505 = vpop.permute.xlu0 %504
  %v507 = vmul.f32 %v490, %v505
  %v508 = vadd.f32 %v144, %v483
  %v509 = vtanh.pop %v508
  %v510 = vmul.f32 %v509, 0.5
  %v511 = vadd.f32 %v510, 0.5
  %v512 = vmul.f32 %v511, %v426
  %514 = vrot.lane.b32.xlu0 %v509, 64
  %v515 = vpop.permute.xlu0 %514
  %v517 = vmul.f32 %v511, %v515
  %519 = vrot.lane.b32.xlu0 %v517, 32
  %v520 = vpop.permute.xlu0 %519
  %v522 = vadd.f32 %v512, %v520
  %v523 = vtanh.pop %v522
  %525 = vrot.lane.b32.xlu0 %v523, 64
  %v526 = vpop.permute.xlu0 %525
  %v528 = vmul.f32 %v511, %v526
  %530 = vrot.lane.b32.xlu0 %v528, 32
  %v531 = vpop.permute.xlu0 %530
  %534 = vrot.lane.b32.xlu0 %v507, 64
  %v535 = vpop.permute.xlu0 %534
  %v537 = vsel %vm207, %v531, %v535
  %v538 = vpack.c.bf16 %v537, %v537
  %v540 = vsel %vm250, %v538, 0
  %542 = vmatprep.subr.bf16.mxu0 0
  %543 = vmatpush1.bf16.msra.mxu0 0
  %544 = vmatprep.subr.bf16.mxu0 0
  %545 = vmatpush1.bf16.msra.mxu0 0
  %546 = vmatprep.subr.bf16.mxu0 0
  %547 = vmatpush1.bf16.msra.mxu0 0
  %548 = vmatprep.subr.bf16.mxu0 0
  %549 = vmatpush1.bf16.msra.mxu0 0
  %550 = vmatprep.subr.bf16.mxu0 %v241
  %551 = vmatpush1.bf16.msra.mxu0 %v240
  %552 = vmatprep.subr.bf16.mxu0 %v239
  %553 = vmatpush1.bf16.msra.mxu0 %v238
  %554 = vmatprep.subr.bf16.mxu0 %v237
  %555 = vmatpush1.bf16.msra.mxu0 %v236
  %556 = vmatprep.subr.bf16.mxu0 %v235
  %557 = vmatpush1.bf16.msra.mxu0 %v234
  %558 = vmatprep.subr.bf16.mxu0 0
  %559 = vmatpush2.bf16.msra.mxu0 0
  %560 = vmatprep.subr.bf16.mxu0 0
  %561 = vmatpush2.bf16.msra.mxu0 0
  %562 = vmatprep.subr.bf16.mxu0 0
  %563 = vmatpush2.bf16.msra.mxu0 0
  %564 = vmatprep.subr.bf16.mxu0 0
  %565 = vmatpush2.bf16.msra.mxu0 0
  %566 = vmatprep.subr.bf16.mxu0 0
  %567 = vmatpush2.bf16.msra.mxu0 0
  %568 = vmatprep.subr.bf16.mxu0 0
  %569 = vmatpush2.bf16.msra.mxu0 0
  %570 = vmatprep.subr.bf16.mxu0 0
  %571 = vmatpush2.bf16.msra.mxu0 0
  %572 = vmatprep.subr.bf16.mxu0 0
  %573 = vmatpush2.bf16.msra.mxu0 0
  %574 = vmatprep.mubr.bf16.mxu0 0
  %575 = vmatmul.mubr.bf16.gmra.mxu0 %v540
  %v576 = vpop.f32.mrf.mxu0
  %v577 = vadd.f32 0.0, %v576
  %v578 = vpop.f32.mrf.mxu0
  %v579 = vadd.f32 0.0, %v578
  %v580 = vpop.f32.mrf.mxu0
  %v581 = vpop.f32.mrf.mxu0
  %582 = vdwg.mxu0
  %v583 = vadd.f32 %v577, %v180
  %v584 = vtanh.pop %v583
  %v585 = vmul.f32 %v584, 0.5
  %v586 = vadd.f32 %v585, 0.5
  %v587 = vmul.f32 %v586, %v501
  %589 = vrot.lane.b32.xlu0 %v584, 64
  %v590 = vpop.permute.xlu0 %589
  %v592 = vmul.f32 %v586, %v590
  %594 = vrot.lane.b32.xlu0 %v592, 32
  %v595 = vpop.permute.xlu0 %594
  %v597 = vadd.f32 %v587, %v595
  %v598 = vtanh.pop %v597
  %600 = vrot.lane.b32.xlu0 %v598, 64
  %v601 = vpop.permute.xlu0 %600
  %v603 = vmul.f32 %v586, %v601
  %v604 = vadd.f32 %v149, %v579
  %v605 = vtanh.pop %v604
  %v606 = vmul.f32 %v605, 0.5
  %v607 = vadd.f32 %v606, 0.5
  %v608 = vmul.f32 %v607, %v522
  %610 = vrot.lane.b32.xlu0 %v605, 64
  %v611 = vpop.permute.xlu0 %610
  %v613 = vmul.f32 %v607, %v611
  %615 = vrot.lane.b32.xlu0 %v613, 32
  %v616 = vpop.permute.xlu0 %615
  %v618 = vadd.f32 %v608, %v616
  %v619 = vtanh.pop %v618
  %621 = vrot.lane.b32.xlu0 %v619, 64
  %v622 = vpop.permute.xlu0 %621
  %v624 = vmul.f32 %v607, %v622
  %626 = vrot.lane.b32.xlu0 %v624, 32
  %v627 = vpop.permute.xlu0 %626
  %630 = vrot.lane.b32.xlu0 %v603, 64
  %v631 = vpop.permute.xlu0 %630
  %v633 = vsel %vm207, %v627, %v631
  %v634 = vpack.c.bf16 %v633, %v633
  %v636 = vsel %vm250, %v634, 0
  %638 = vmatprep.subr.bf16.mxu0 0
  %639 = vmatpush1.bf16.msra.mxu0 0
  %640 = vmatprep.subr.bf16.mxu0 0
  %641 = vmatpush1.bf16.msra.mxu0 0
  %642 = vmatprep.subr.bf16.mxu0 0
  %643 = vmatpush1.bf16.msra.mxu0 0
  %644 = vmatprep.subr.bf16.mxu0 0
  %645 = vmatpush1.bf16.msra.mxu0 0
  %646 = vmatprep.subr.bf16.mxu0 %v241
  %647 = vmatpush1.bf16.msra.mxu0 %v240
  %648 = vmatprep.subr.bf16.mxu0 %v239
  %649 = vmatpush1.bf16.msra.mxu0 %v238
  %650 = vmatprep.subr.bf16.mxu0 %v237
  %651 = vmatpush1.bf16.msra.mxu0 %v236
  %652 = vmatprep.subr.bf16.mxu0 %v235
  %653 = vmatpush1.bf16.msra.mxu0 %v234
  %654 = vmatprep.subr.bf16.mxu0 0
  %655 = vmatpush2.bf16.msra.mxu0 0
  %656 = vmatprep.subr.bf16.mxu0 0
  %657 = vmatpush2.bf16.msra.mxu0 0
  %658 = vmatprep.subr.bf16.mxu0 0
  %659 = vmatpush2.bf16.msra.mxu0 0
  %660 = vmatprep.subr.bf16.mxu0 0
  %661 = vmatpush2.bf16.msra.mxu0 0
  %662 = vmatprep.subr.bf16.mxu0 0
  %663 = vmatpush2.bf16.msra.mxu0 0
  %664 = vmatprep.subr.bf16.mxu0 0
  %665 = vmatpush2.bf16.msra.mxu0 0
  %666 = vmatprep.subr.bf16.mxu0 0
  %667 = vmatpush2.bf16.msra.mxu0 0
  %668 = vmatprep.subr.bf16.mxu0 0
  %669 = vmatpush2.bf16.msra.mxu0 0
  %670 = vmatprep.mubr.bf16.mxu0 0
  %671 = vmatmul.mubr.bf16.gmra.mxu0 %v636
  %v672 = vpop.f32.mrf.mxu0
  %v673 = vadd.f32 0.0, %v672
  %v674 = vpop.f32.mrf.mxu0
  %v675 = vadd.f32 0.0, %v674
  %v676 = vpop.f32.mrf.mxu0
  %v677 = vpop.f32.mrf.mxu0
  %678 = vdwg.mxu0
  %v679 = vadd.f32 %v673, %v180
  %v680 = vtanh.pop %v679
  %v681 = vmul.f32 %v680, 0.5
  %v682 = vadd.f32 %v681, 0.5
  %v683 = vmul.f32 %v682, %v597
  %685 = vrot.lane.b32.xlu0 %v680, 64
  %v686 = vpop.permute.xlu0 %685
  %v688 = vmul.f32 %v682, %v686
  %690 = vrot.lane.b32.xlu0 %v688, 32
  %v691 = vpop.permute.xlu0 %690
  %v693 = vadd.f32 %v683, %v691
  %v694 = vtanh.pop %v693
  %696 = vrot.lane.b32.xlu0 %v694, 64
  %v697 = vpop.permute.xlu0 %696
  %v699 = vmul.f32 %v682, %v697
  %v700 = vadd.f32 %v154, %v675
  %v701 = vtanh.pop %v700
  %v702 = vmul.f32 %v701, 0.5
  %v703 = vadd.f32 %v702, 0.5
  %v704 = vmul.f32 %v703, %v618
  %706 = vrot.lane.b32.xlu0 %v701, 64
  %v707 = vpop.permute.xlu0 %706
  %v709 = vmul.f32 %v703, %v707
  %711 = vrot.lane.b32.xlu0 %v709, 32
  %v712 = vpop.permute.xlu0 %711
  %v714 = vadd.f32 %v704, %v712
  %v715 = vtanh.pop %v714
  %717 = vrot.lane.b32.xlu0 %v715, 64
  %v718 = vpop.permute.xlu0 %717
  %v720 = vmul.f32 %v703, %v718
  %722 = vrot.lane.b32.xlu0 %v720, 32
  %v723 = vpop.permute.xlu0 %722
  %726 = vrot.lane.b32.xlu0 %v699, 64
  %v727 = vpop.permute.xlu0 %726
  %v729 = vsel %vm207, %v723, %v727
  %v730 = vpack.c.bf16 %v729, %v729
  %v732 = vsel %vm250, %v730, 0
  %734 = vmatprep.subr.bf16.mxu0 0
  %735 = vmatpush1.bf16.msra.mxu0 0
  %736 = vmatprep.subr.bf16.mxu0 0
  %737 = vmatpush1.bf16.msra.mxu0 0
  %738 = vmatprep.subr.bf16.mxu0 0
  %739 = vmatpush1.bf16.msra.mxu0 0
  %740 = vmatprep.subr.bf16.mxu0 0
  %741 = vmatpush1.bf16.msra.mxu0 0
  %742 = vmatprep.subr.bf16.mxu0 %v241
  %743 = vmatpush1.bf16.msra.mxu0 %v240
  %744 = vmatprep.subr.bf16.mxu0 %v239
  %745 = vmatpush1.bf16.msra.mxu0 %v238
  %746 = vmatprep.subr.bf16.mxu0 %v237
  %747 = vmatpush1.bf16.msra.mxu0 %v236
  %748 = vmatprep.subr.bf16.mxu0 %v235
  %749 = vmatpush1.bf16.msra.mxu0 %v234
  %750 = vmatprep.subr.bf16.mxu0 0
  %751 = vmatpush2.bf16.msra.mxu0 0
  %752 = vmatprep.subr.bf16.mxu0 0
  %753 = vmatpush2.bf16.msra.mxu0 0
  %754 = vmatprep.subr.bf16.mxu0 0
  %755 = vmatpush2.bf16.msra.mxu0 0
  %756 = vmatprep.subr.bf16.mxu0 0
  %757 = vmatpush2.bf16.msra.mxu0 0
  %758 = vmatprep.subr.bf16.mxu0 0
  %759 = vmatpush2.bf16.msra.mxu0 0
  %760 = vmatprep.subr.bf16.mxu0 0
  %761 = vmatpush2.bf16.msra.mxu0 0
  %762 = vmatprep.subr.bf16.mxu0 0
  %763 = vmatpush2.bf16.msra.mxu0 0
  %764 = vmatprep.subr.bf16.mxu0 0
  %765 = vmatpush2.bf16.msra.mxu0 0
  %766 = vmatprep.mubr.bf16.mxu0 0
  %767 = vmatmul.mubr.bf16.gmra.mxu0 %v732
  %v768 = vpop.f32.mrf.mxu0
  %v769 = vadd.f32 0.0, %v768
  %v770 = vpop.f32.mrf.mxu0
  %v771 = vadd.f32 0.0, %v770
  %v772 = vpop.f32.mrf.mxu0
  %v773 = vpop.f32.mrf.mxu0
  %774 = vdwg.mxu0
  %v775 = vadd.f32 %v769, %v180
  %v776 = vtanh.pop %v775
  %v777 = vmul.f32 %v776, 0.5
  %v778 = vadd.f32 %v777, 0.5
  %v779 = vmul.f32 %v778, %v693
  %781 = vrot.lane.b32.xlu0 %v776, 64
  %v782 = vpop.permute.xlu0 %781
  %v784 = vmul.f32 %v778, %v782
  %786 = vrot.lane.b32.xlu0 %v784, 32
  %v787 = vpop.permute.xlu0 %786
  %v789 = vadd.f32 %v779, %v787
  %v790 = vtanh.pop %v789
  %792 = vrot.lane.b32.xlu0 %v790, 64
  %v793 = vpop.permute.xlu0 %792
  %v795 = vmul.f32 %v778, %v793
  %v796 = vadd.f32 %v159, %v771
  %v797 = vtanh.pop %v796
  %v798 = vmul.f32 %v797, 0.5
  %v799 = vadd.f32 %v798, 0.5
  %v800 = vmul.f32 %v799, %v714
  %802 = vrot.lane.b32.xlu0 %v797, 64
  %v803 = vpop.permute.xlu0 %802
  %v805 = vmul.f32 %v799, %v803
  %807 = vrot.lane.b32.xlu0 %v805, 32
  %v808 = vpop.permute.xlu0 %807
  %v810 = vadd.f32 %v800, %v808
  %v811 = vtanh.pop %v810
  %813 = vrot.lane.b32.xlu0 %v811, 64
  %v814 = vpop.permute.xlu0 %813
  %v816 = vmul.f32 %v799, %v814
  %818 = vrot.lane.b32.xlu0 %v816, 32
  %v819 = vpop.permute.xlu0 %818
  %822 = vrot.lane.b32.xlu0 %v795, 64
  %v823 = vpop.permute.xlu0 %822
  %v825 = vsel %vm207, %v819, %v823
  %v826 = vpack.c.bf16 %v825, %v825
  %v828 = vsel %vm250, %v826, 0
  %830 = vmatprep.subr.bf16.mxu0 0
  %831 = vmatpush1.bf16.msra.mxu0 0
  %832 = vmatprep.subr.bf16.mxu0 0
  %833 = vmatpush1.bf16.msra.mxu0 0
  %834 = vmatprep.subr.bf16.mxu0 0
  %835 = vmatpush1.bf16.msra.mxu0 0
  %836 = vmatprep.subr.bf16.mxu0 0
  %837 = vmatpush1.bf16.msra.mxu0 0
  %838 = vmatprep.subr.bf16.mxu0 %v241
  %839 = vmatpush1.bf16.msra.mxu0 %v240
  %840 = vmatprep.subr.bf16.mxu0 %v239
  %841 = vmatpush1.bf16.msra.mxu0 %v238
  %842 = vmatprep.subr.bf16.mxu0 %v237
  %843 = vmatpush1.bf16.msra.mxu0 %v236
  %844 = vmatprep.subr.bf16.mxu0 %v235
  %845 = vmatpush1.bf16.msra.mxu0 %v234
  %846 = vmatprep.subr.bf16.mxu0 0
  %847 = vmatpush2.bf16.msra.mxu0 0
  %848 = vmatprep.subr.bf16.mxu0 0
  %849 = vmatpush2.bf16.msra.mxu0 0
  %850 = vmatprep.subr.bf16.mxu0 0
  %851 = vmatpush2.bf16.msra.mxu0 0
  %852 = vmatprep.subr.bf16.mxu0 0
  %853 = vmatpush2.bf16.msra.mxu0 0
  %854 = vmatprep.subr.bf16.mxu0 0
  %855 = vmatpush2.bf16.msra.mxu0 0
  %856 = vmatprep.subr.bf16.mxu0 0
  %857 = vmatpush2.bf16.msra.mxu0 0
  %858 = vmatprep.subr.bf16.mxu0 0
  %859 = vmatpush2.bf16.msra.mxu0 0
  %860 = vmatprep.subr.bf16.mxu0 0
  %861 = vmatpush2.bf16.msra.mxu0 0
  %862 = vmatprep.mubr.bf16.mxu0 0
  %863 = vmatmul.mubr.bf16.gmra.mxu0 %v828
  %v864 = vpop.f32.mrf.mxu0
  %v865 = vadd.f32 0.0, %v864
  %v866 = vpop.f32.mrf.mxu0
  %v867 = vadd.f32 0.0, %v866
  %v868 = vpop.f32.mrf.mxu0
  %v869 = vpop.f32.mrf.mxu0
  %870 = vdwg.mxu0
  %v871 = vadd.f32 %v865, %v180
  %v872 = vtanh.pop %v871
  %v873 = vmul.f32 %v872, 0.5
  %v874 = vadd.f32 %v873, 0.5
  %v875 = vmul.f32 %v874, %v789
  %877 = vrot.lane.b32.xlu0 %v872, 64
  %v878 = vpop.permute.xlu0 %877
  %v880 = vmul.f32 %v874, %v878
  %882 = vrot.lane.b32.xlu0 %v880, 32
  %v883 = vpop.permute.xlu0 %882
  %v885 = vadd.f32 %v875, %v883
  %v886 = vtanh.pop %v885
  %888 = vrot.lane.b32.xlu0 %v886, 64
  %v889 = vpop.permute.xlu0 %888
  %v891 = vmul.f32 %v874, %v889
  %v892 = vadd.f32 %v164, %v867
  %v893 = vtanh.pop %v892
  %v894 = vmul.f32 %v893, 0.5
  %v895 = vadd.f32 %v894, 0.5
  %v896 = vmul.f32 %v895, %v810
  %898 = vrot.lane.b32.xlu0 %v893, 64
  %v899 = vpop.permute.xlu0 %898
  %v901 = vmul.f32 %v895, %v899
  %903 = vrot.lane.b32.xlu0 %v901, 32
  %v904 = vpop.permute.xlu0 %903
  %v906 = vadd.f32 %v896, %v904
  %v907 = vtanh.pop %v906
  %909 = vrot.lane.b32.xlu0 %v907, 64
  %v910 = vpop.permute.xlu0 %909
  %v912 = vmul.f32 %v895, %v910
  %914 = vrot.lane.b32.xlu0 %v912, 32
  %v915 = vpop.permute.xlu0 %914
  %918 = vrot.lane.b32.xlu0 %v891, 64
  %v919 = vpop.permute.xlu0 %918
  %v921 = vsel %vm207, %v915, %v919
  %v922 = vpack.c.bf16 %v921, %v921
  %v924 = vsel %vm250, %v922, 0
  %926 = vmatprep.subr.bf16.mxu0 0
  %927 = vmatpush1.bf16.msra.mxu0 0
  %928 = vmatprep.subr.bf16.mxu0 0
  %929 = vmatpush1.bf16.msra.mxu0 0
  %930 = vmatprep.subr.bf16.mxu0 0
  %931 = vmatpush1.bf16.msra.mxu0 0
  %932 = vmatprep.subr.bf16.mxu0 0
  %933 = vmatpush1.bf16.msra.mxu0 0
  %934 = vmatprep.subr.bf16.mxu0 %v241
  %935 = vmatpush1.bf16.msra.mxu0 %v240
  %936 = vmatprep.subr.bf16.mxu0 %v239
  %937 = vmatpush1.bf16.msra.mxu0 %v238
  %938 = vmatprep.subr.bf16.mxu0 %v237
  %939 = vmatpush1.bf16.msra.mxu0 %v236
  %940 = vmatprep.subr.bf16.mxu0 %v235
  %941 = vmatpush1.bf16.msra.mxu0 %v234
  %942 = vmatprep.subr.bf16.mxu0 0
  %943 = vmatpush2.bf16.msra.mxu0 0
  %944 = vmatprep.subr.bf16.mxu0 0
  %945 = vmatpush2.bf16.msra.mxu0 0
  %946 = vmatprep.subr.bf16.mxu0 0
  %947 = vmatpush2.bf16.msra.mxu0 0
  %948 = vmatprep.subr.bf16.mxu0 0
  %949 = vmatpush2.bf16.msra.mxu0 0
  %950 = vmatprep.subr.bf16.mxu0 0
  %951 = vmatpush2.bf16.msra.mxu0 0
  %952 = vmatprep.subr.bf16.mxu0 0
  %953 = vmatpush2.bf16.msra.mxu0 0
  %954 = vmatprep.subr.bf16.mxu0 0
  %955 = vmatpush2.bf16.msra.mxu0 0
  %956 = vmatprep.subr.bf16.mxu0 0
  %957 = vmatpush2.bf16.msra.mxu0 0
  %958 = vmatprep.mubr.bf16.mxu0 0
  %959 = vmatmul.mubr.bf16.gmra.mxu0 %v924
  %v960 = vpop.f32.mrf.mxu0
  %v961 = vadd.f32 0.0, %v960
  %v962 = vpop.f32.mrf.mxu0
  %v963 = vpop.f32.mrf.mxu0
  %v964 = vpop.f32.mrf.mxu0
  %965 = vdwg.mxu0
  %v966 = vadd.f32 %v961, %v180
  %v967 = vtanh.pop %v966
  %v968 = vmul.f32 %v967, 0.5
  %v969 = vadd.f32 %v968, 0.5
  %v970 = vmul.f32 %v969, %v885
  %972 = vrot.lane.b32.xlu0 %v967, 64
  %v973 = vpop.permute.xlu0 %972
  %v975 = vmul.f32 %v969, %v973
  %977 = vrot.lane.b32.xlu0 %v975, 32
  %v978 = vpop.permute.xlu0 %977
  %v980 = vadd.f32 %v970, %v978
  %v981 = vtanh.pop %v980
  %983 = vrot.lane.b32.xlu0 %v981, 64
  %v984 = vpop.permute.xlu0 %983
  %v986 = vmul.f32 %v969, %v984
  %988 = vrot.lane.b32.xlu0 %v986, 32
  %v989 = vpop.permute.xlu0 %988
  %991 = vst.msk [vmem:[%s5] sm:$0xff] %vm207, %v989
  // Predicated region
  $region22: #{encoder_forward.1} parent=0 // pred_check
    _
  $region23: #{encoder_forward.1} parent=0 // pred_check_branch
    %993 = sbr.rel (0) target = $region25
  $region24: #{encoder_forward.1} parent=0 // pred_region
    _
  $region25: #{encoder_forward.1} parent=0 // pred_fallthru
    _
  // Predicated region
  $region26: #{encoder_forward.1} parent=0 // pred_check
    _
  $region27: #{encoder_forward.1} parent=0 // pred_check_branch
    %995 = sbr.rel (0) target = $region29
  $region28: #{encoder_forward.1} parent=0 // pred_region
    _
  $region29: #{encoder_forward.1} parent=0 // pred_fallthru
    _

</llo_original>
